<compile_context>
chip_gen: v7x
topology: tpu7x:2x2x1
jax: 0.10.0
libtpu: 0.0.40
codegen_flags: <defaults>
</compile_context>

<pallas_src>
import functools

import jax
import jax.numpy as jnp
from jax.experimental import pallas as pl
from jax.experimental.pallas import tpu as pltpu


# ---------------------------------------------------------------------------
# Kernel 1: block-recurrent attention + state update + LayerNorm
# ---------------------------------------------------------------------------
def attn_kernel(x_ref, state_ref, wqkv_ref, wo_ref, wsqkv_ref, wso_ref,
                gamma_ref, beta_ref, hn_ref, new_state_ref):
    TB, T, D = x_ref.shape
    S = state_ref.shape[1]

    x2 = x_ref[...].reshape(TB * T, D)                              # bf16
    st2 = state_ref[...].astype(jnp.bfloat16).reshape(TB * S, D)    # f32 -> bf16

    # fused qkv projections: one (M, D) @ (D, 3D) matmul each (scale folded in wq)
    qkv = jnp.dot(x2, wqkv_ref[...], preferred_element_type=jnp.float32)
    sqkv = jnp.dot(st2, wsqkv_ref[...], preferred_element_type=jnp.float32)

    q = qkv[:, :D].astype(jnp.bfloat16).reshape(TB, T, D)
    kx = qkv[:, D:2 * D].astype(jnp.bfloat16).reshape(TB, T, D)
    vx = qkv[:, 2 * D:].astype(jnp.bfloat16).reshape(TB, T, D)
    qs = sqkv[:, :D].astype(jnp.bfloat16).reshape(TB, S, D)
    ks = sqkv[:, D:2 * D].astype(jnp.bfloat16).reshape(TB, S, D)
    vs = sqkv[:, 2 * D:].astype(jnp.bfloat16).reshape(TB, S, D)

    # keys/values over [state; x] (single matmul + single softmax reduction)
    k_cat = jnp.concatenate([ks, kx], axis=1)                       # (TB, S+T, D)
    v_cat = jnp.concatenate([vs, vx], axis=1)                       # (TB, S+T, D)

    dn_qk = (((2,), (2,)), ((0,), (0,)))    # contract feature dim, batch over TB
    dn_av = (((2,), (1,)), ((0,), (0,)))    # probs @ values

    # --- x attends over [state; x]
    s = jax.lax.dot_general(q, k_cat, dn_qk, preferred_element_type=jnp.float32)
    m = jnp.max(s, axis=-1, keepdims=True)
    e = jnp.exp(s - m)
    inv = pl.reciprocal(jnp.sum(e, axis=-1, keepdims=True), approx=True)
    ctx = jax.lax.dot_general(e.astype(jnp.bfloat16), v_cat, dn_av,
                              preferred_element_type=jnp.float32) * inv
    attn_out = jnp.dot(ctx.reshape(TB * T, D).astype(jnp.bfloat16), wo_ref[...],
                       preferred_element_type=jnp.float32)          # (TB*T, D)

    # --- recurrent state update: state queries attend over the current block
    s2 = jax.lax.dot_general(qs, kx, dn_qk, preferred_element_type=jnp.float32)
    m2 = jnp.max(s2, axis=-1, keepdims=True)
    e2 = jnp.exp(s2 - m2)
    inv2 = pl.reciprocal(jnp.sum(e2, axis=-1, keepdims=True), approx=True)
    ns_ctx = jax.lax.dot_general(e2.astype(jnp.bfloat16), vx, dn_av,
                                 preferred_element_type=jnp.float32) * inv2
    new_state = jnp.dot(ns_ctx.reshape(TB * S, D).astype(jnp.bfloat16), wso_ref[...],
                        preferred_element_type=jnp.float32)
    new_state_ref[...] = new_state.reshape(TB, S, D).astype(new_state_ref.dtype)

    # --- LayerNorm over the feature dim
    mean = jnp.mean(attn_out, axis=-1, keepdims=True)
    cen = attn_out - mean
    var = jnp.mean(cen * cen, axis=-1, keepdims=True)
    hn = cen * jax.lax.rsqrt(var + 1e-5)
    hn = hn * gamma_ref[...] + beta_ref[...]
    hn_ref[...] = hn.astype(hn_ref.dtype)                           # (TB*T, D) bf16


# ---------------------------------------------------------------------------
# Kernel 2: vocab projection (HBM-bound weight stream)
# ---------------------------------------------------------------------------
def logits_kernel(hn_ref, wvocab_ref, out_ref):
    out_ref[...] = jnp.dot(hn_ref[...], wvocab_ref[...],
                           preferred_element_type=jnp.float32).astype(out_ref.dtype)


# ---------------------------------------------------------------------------
# Host-side helpers
# ---------------------------------------------------------------------------
def _vmem_capacity_bytes():
    try:
        info = pltpu.get_tpu_info()
        cap = getattr(info, "vmem_capacity_bytes", None)
        if cap:
            return int(cap)
    except Exception:
        pass
    return 64 << 20  # conservative (v7x) fallback


def _pick_tv(V, target, M, D, budget):
    """Largest multiple-of-128 divisor of V that is <= target and fits VMEM."""
    cands = [c for c in range(min(target, V), 0, -128) if c > 0 and V % c == 0]
    if not cands:
        cands = [V]
    for c in cands:
        need = M * D * 2 + 3 * D * c * 2 + 2 * M * c * 2
        if need <= budget:
            return c
    return cands[-1]


def init_params(key, num_tokens, dim, state_len):
    keys = jax.random.split(key, 10)
    s = 1.0 / jnp.sqrt(jnp.float32(dim))
    wdt = jnp.bfloat16   # ship matmul weights as bf16 (MXU-native, half VMEM/HBM)

    def w(k, scale=None):
        m = jax.random.normal(k, (dim, dim), jnp.float32) * s
        if scale is not None:
            m = m * scale   # one-time host-side fold of 1/sqrt(D) into the query weight
        return m.astype(wdt)

    attn_scale = 1.0 / jnp.sqrt(jnp.float32(dim))
    wq, wk, wv = w(keys[1], attn_scale), w(keys[2]), w(keys[3])
    wsq, wsk, wsv = w(keys[5], attn_scale), w(keys[6]), w(keys[7])

    return {
        "embed":  jax.random.normal(keys[0], (num_tokens, dim), jnp.float32) * 0.02,
        "wqkv":   jnp.concatenate([wq, wk, wv], axis=1),        # (D, 3D) fused
        "wo":     w(keys[4]),
        "wsqkv":  jnp.concatenate([wsq, wsk, wsv], axis=1),     # (D, 3D) fused
        "wso":    w(keys[8]),
        "gamma":  jnp.ones((1, dim), jnp.float32),              # nn.LayerNorm init
        "beta":   jnp.zeros((1, dim), jnp.float32),
        # nn.Linear(dim, num_tokens, bias=False).weight is (V, D); pre-transpose to (D, V)
        "wvocab": (jax.random.normal(keys[9], (num_tokens, dim), jnp.float32) * s).T.astype(wdt),
        # TODO(synk): on v7x, wvocab could be shipped fp8 (bf16 x fp8 MXU) if accuracy allows.
        "state_len": state_len,
    }


def block_recurrent_decoder(tokens, params, state=None, *, tv=None, tb=None):
    B, T = tokens.shape
    V, D = params["embed"].shape
    S = params["state_len"]
    bf16, f32 = 2, 4

    cap = _vmem_capacity_bytes()
    budget = (cap * 7) // 8          # ~56 MiB on v7x, ~112 MiB on v5e/v6e

    # embedding lookup (gather) kept as JAX glue
    x = jnp.take(params["embed"], tokens, axis=0).astype(jnp.bfloat16)   # (B, T, D)
    if state is None:
        state = jnp.zeros((B, S, D), jnp.float32)
    state_in = state.astype(jnp.float32)

    # --------------------------- call 1: attention ---------------------------
    if tb is None:
        tb = min(B, max(1, 256 // max(T, 1)))   # target ~256 rows feeding the MXU
    while B % tb:
        tb -= 1

    def const_spec(shape):   # grid-invariant weights: single buffer, DMA'd once
        return pl.BlockSpec(shape, lambda b: (0,) * len(shape),
                            pipeline_mode=pl.Buffered(1))

    w_bytes = 8 * D * D * bf16 + 2 * D * f32
    io_bytes = 2 * 2 * (tb * T * D * bf16 + tb * S * D * f32)     # in + out, double-buffered
    interm_bytes = ((tb * T * 3 * D + tb * S * 3 * D) * f32       # fused qkv outputs
                    + 2 * tb * (T + S) * D * bf16                 # k_cat / v_cat
                    + 2 * (tb * T * (T + S) + tb * S * T) * f32   # scores + exp
                    + (2 * tb * T * D + tb * S * D) * f32)        # ctx / attn_out / ns_ctx
    need1 = w_bytes + io_bytes + interm_bytes
    # TODO(synk): stream the projection weights when they no longer fit VMEM (large D on v7x).
    assert need1 <= budget, f"attention tile does not fit VMEM ({need1} > {budget} bytes)"
    vmem1 = min(max(int(1.5 * need1), 32 << 20), budget)

    attn_flops = (2 * B * T * 3 * D * D + 2 * B * S * 3 * D * D      # fused projections
                  + 2 * B * T * D * D + 2 * B * S * D * D            # wo / wso
                  + 4 * B * T * (S + T) * D + 4 * B * S * T * D)     # attention
    attn_bytes = (B * T * D * bf16 + 2 * B * S * D * f32
                  + 8 * D * D * bf16 + 2 * D * f32 + B * T * D * bf16)

    hn, new_state = pl.pallas_call(
        attn_kernel,
        out_shape=(jax.ShapeDtypeStruct((B * T, D), jnp.bfloat16),
                   jax.ShapeDtypeStruct((B, S, D), jnp.float32)),
        grid_spec=pltpu.PrefetchScalarGridSpec(
            num_scalar_prefetch=0,
            grid=(B // tb,),
            in_specs=[
                pl.BlockSpec((tb, T, D), lambda b: (b, 0, 0)),   # x
                pl.BlockSpec((tb, S, D), lambda b: (b, 0, 0)),   # state
                const_spec((D, 3 * D)),                          # wqkv (fused, q pre-scaled)
                const_spec((D, D)),                              # wo
                const_spec((D, 3 * D)),                          # wsqkv (fused, q pre-scaled)
                const_spec((D, D)),                              # wso
                const_spec((1, D)), const_spec((1, D)),          # gamma, beta
            ],
            out_specs=[
                pl.BlockSpec((tb * T, D), lambda b: (b, 0)),     # hn (bf16)
                pl.BlockSpec((tb, S, D), lambda b: (b, 0, 0)),   # new_state (f32)
            ],
        ),
        compiler_params=pltpu.CompilerParams(
            dimension_semantics=("parallel",),
            vmem_limit_bytes=int(vmem1)),
        input_output_aliases={1: 1},   # update the recurrent state in place
        cost_estimate=pl.CostEstimate(flops=int(attn_flops),
                                      transcendentals=int(B * T * (S + T) + B * S * T),
                                      bytes_accessed=int(attn_bytes)),
    )(x, state_in,
      params["wqkv"], params["wo"], params["wsqkv"], params["wso"],
      params["gamma"], params["beta"])

    # ------------------------ call 2: vocab projection ------------------------
    M = B * T
    if tv is None:
        tv_target = 1024 if cap >= (100 << 20) else 512   # 128-MiB parts vs 64-MiB v7x
    else:
        tv_target = tv
    tv = _pick_tv(V, tv_target, M, D, budget)
    wv_buf = max(1, min(3, V // tv))                       # deep-buffer the weight stream

    need2 = M * D * bf16 + wv_buf * D * tv * bf16 + 2 * M * tv * bf16
    vmem2 = min(max(2 * need2, 32 << 20), budget)

    logits = pl.pallas_call(
        logits_kernel,
        out_shape=jax.ShapeDtypeStruct((M, V), jnp.bfloat16),       # bf16 store (HBM-bound)
        grid_spec=pltpu.PrefetchScalarGridSpec(
            num_scalar_prefetch=0,
            grid=(V // tv,),
            in_specs=[
                pl.BlockSpec((M, D), lambda j: (0, 0),
                             pipeline_mode=pl.Buffered(1)),         # hn: resident, 1 buffer
                pl.BlockSpec((D, tv), lambda j: (0, j),
                             pipeline_mode=pl.Buffered(wv_buf)),    # wvocab: streamed once
            ],
            out_specs=pl.BlockSpec((M, tv), lambda j: (0, j)),      # lane-dense bf16 tile
        ),
        compiler_params=pltpu.CompilerParams(
            dimension_semantics=("parallel",),                      # shards over v7x cores
            vmem_limit_bytes=int(vmem2)),
        cost_estimate=pl.CostEstimate(flops=int(2 * M * D * V),
                                      transcendentals=0,
                                      bytes_accessed=int(M * D * bf16 + D * V * bf16
                                                         + M * V * bf16)),
    )(hn, params["wvocab"])

    return logits.reshape(B, T, V), new_state


# ---------------------------------------------------------------------------
# Pure-JAX reference (same bf16 cast points) for sanity checking
# ---------------------------------------------------------------------------
def reference_forward(tokens, params, state=None):
    B, T = tokens.shape
    V, D = params["embed"].shape
    S = params["state_len"]
    x = jnp.take(params["embed"], tokens, axis=0).astype(jnp.bfloat16)
    if state is None:
        state = jnp.zeros((B, S, D), jnp.float32)
    st = state.astype(jnp.bfloat16)
    dot = functools.partial(jnp.einsum, preferred_element_type=jnp.float32)

    wq, wk, wv = (params["wqkv"][:, :D], params["wqkv"][:, D:2 * D], params["wqkv"][:, 2 * D:])
    wsq, wsk, wsv = (params["wsqkv"][:, :D], params["wsqkv"][:, D:2 * D], params["wsqkv"][:, 2 * D:])

    q = dot("btd,de->bte", x, wq).astype(jnp.bfloat16)     # 1/sqrt(D) already folded in wq
    kx = dot("btd,de->bte", x, wk).astype(jnp.bfloat16)
    vx = dot("btd,de->bte", x, wv).astype(jnp.bfloat16)
    qs = dot("bsd,de->bse", st, wsq).astype(jnp.bfloat16)
    ks = dot("bsd,de->bse", st, wsk).astype(jnp.bfloat16)
    vs = dot("bsd,de->bse", st, wsv).astype(jnp.bfloat16)

    k = jnp.concatenate([ks, kx], axis=1)
    v = jnp.concatenate([vs, vx], axis=1)
    p = jax.nn.softmax(dot("btd,bkd->btk", q, k), axis=-1).astype(jnp.bfloat16)
    attn_out = dot("btd,de->bte", dot("btk,bkd->btd", p, v).astype(jnp.bfloat16), params["wo"])

    p2 = jax.nn.softmax(dot("bsd,btd->bst", qs, kx), axis=-1).astype(jnp.bfloat16)
    new_state = dot("bsd,de->bse", dot("bst,btd->bsd", p2, vx).astype(jnp.bfloat16),
                    params["wso"])

    mean = jnp.mean(attn_out, axis=-1, keepdims=True)
    var = jnp.mean((attn_out - mean) ** 2, axis=-1, keepdims=True)
    hn = (attn_out - mean) * jax.lax.rsqrt(var + 1e-5)
    hn = hn * params["gamma"] + params["beta"]
    logits = dot("btd,dv->btv", hn.astype(jnp.bfloat16), params["wvocab"])
    return logits, new_state


if __name__ == "__main__":
    # hardware-friendly small shapes: D, V multiples of 128; T, S multiples of 16
    NUM_TOKENS = 1024
    DIM = 128
    BATCH = 2
    SEQ = 16
    STATE_LEN = 16

    key = jax.random.PRNGKey(0)
    k_params, k_tokens = jax.random.split(key)

    params = init_params(k_params, NUM_TOKENS, DIM, STATE_LEN)
    tokens = jax.random.randint(k_tokens, (BATCH, SEQ), 0, NUM_TOKENS, dtype=jnp.int32)

    # tv/tb overridden here only to exercise multi-tile grids at demo scale;
    # production default (tv=None) auto-sizes from the detected VMEM capacity.
    logits, state = block_recurrent_decoder(tokens, params, state=None, tv=256, tb=1)
    jax.block_until_ready((logits, state))

    assert logits.shape == (BATCH, SEQ, NUM_TOKENS)
    assert state.shape == (BATCH, STATE_LEN, DIM)
    assert logits.dtype == jnp.bfloat16
    assert not bool(jnp.any(jnp.isnan(logits.astype(jnp.float32))))
    assert not bool(jnp.any(jnp.isnan(state)))

    ref_logits, ref_state = reference_forward(tokens, params, state=None)

    def rel_err(a, b):
        a = a.astype(jnp.float32)
        b = b.astype(jnp.float32)
        return float(jnp.max(jnp.abs(a - b)) / (jnp.max(jnp.abs(b)) + 1e-6))

    assert rel_err(logits, ref_logits) < 0.1, rel_err(logits, ref_logits)
    assert rel_err(state, ref_state) < 0.1, rel_err(state, ref_state)

    print("KERNEL_OK")
</pallas_src>

<mosaic_0001>
module attributes {stable_mosaic.version = 11 : i64} {
  func.func @attn_kernel(%arg0: i32, %arg1: memref<1x16x128xbf16, #tpu.memory_space<vmem>>, %arg2: memref<1x16x128xf32, #tpu.memory_space<vmem>>, %arg3: memref<128x384xbf16, #tpu.memory_space<vmem>>, %arg4: memref<128x128xbf16, #tpu.memory_space<vmem>>, %arg5: memref<128x384xbf16, #tpu.memory_space<vmem>>, %arg6: memref<128x128xbf16, #tpu.memory_space<vmem>>, %arg7: memref<1x128xf32, #tpu.memory_space<vmem>>, %arg8: memref<1x128xf32, #tpu.memory_space<vmem>>, %arg9: memref<16x128xbf16, #tpu.memory_space<vmem>>, %arg10: memref<1x16x128xf32, #tpu.memory_space<vmem>>) attributes {dimension_semantics = [#tpu.dimension_semantics<parallel>], iteration_bounds = array<i64: 2>, scalar_prefetch = 0 : i64, scratch_operands = 0 : i64, tpu.core_type = #tpu.core_type<tc>, window_params = [{transform_indices = @transform_0, window_bounds = array<i64: 1, 16, 128>}, {transform_indices = @transform_1, window_bounds = array<i64: 1, 16, 128>}, {pipeline_mode = #tpu.pipeline_mode<synchronous>, transform_indices = @transform_2, window_bounds = array<i64: 128, 384>}, {pipeline_mode = #tpu.pipeline_mode<synchronous>, transform_indices = @transform_3, window_bounds = array<i64: 128, 128>}, {pipeline_mode = #tpu.pipeline_mode<synchronous>, transform_indices = @transform_4, window_bounds = array<i64: 128, 384>}, {pipeline_mode = #tpu.pipeline_mode<synchronous>, transform_indices = @transform_5, window_bounds = array<i64: 128, 128>}, {pipeline_mode = #tpu.pipeline_mode<synchronous>, transform_indices = @transform_6, window_bounds = array<i64: 1, 128>}, {pipeline_mode = #tpu.pipeline_mode<synchronous>, transform_indices = @transform_7, window_bounds = array<i64: 1, 128>}, {transform_indices = @transform_8, window_bounds = array<i64: 16, 128>}, {transform_indices = @transform_9, window_bounds = array<i64: 1, 16, 128>}]} {
    %c0 = arith.constant 0 : index
    %c0_0 = arith.constant 0 : index
    %c0_1 = arith.constant 0 : index
    %0 = vector.load %arg1[%c0, %c0_0, %c0_1] : memref<1x16x128xbf16, #tpu.memory_space<vmem>>, vector<1x16x128xbf16>
    %1 = vector.shape_cast %0 : vector<1x16x128xbf16> to vector<16x128xbf16>
    %c0_2 = arith.constant 0 : index
    %c0_3 = arith.constant 0 : index
    %c0_4 = arith.constant 0 : index
    %2 = vector.load %arg2[%c0_2, %c0_3, %c0_4] : memref<1x16x128xf32, #tpu.memory_space<vmem>>, vector<1x16x128xf32>
    %3 = arith.truncf %2 : vector<1x16x128xf32> to vector<1x16x128xbf16>
    %4 = vector.shape_cast %3 : vector<1x16x128xbf16> to vector<16x128xbf16>
    %c0_5 = arith.constant 0 : index
    %c0_6 = arith.constant 0 : index
    %5 = vector.load %arg3[%c0_5, %c0_6] : memref<128x384xbf16, #tpu.memory_space<vmem>>, vector<128x384xbf16>
    %cst = arith.constant dense<0.000000e+00> : vector<16x384xf32>
    %6 = tpu.matmul %1, %5, %cst {dimension_numbers = #tpu.dot_dimension_numbers<[1], [0], [0], [1], [0, 0, 1, 1], [], []>} : vector<16x128xbf16>, vector<128x384xbf16>, vector<16x384xf32> -> vector<16x384xf32>
    %c0_7 = arith.constant 0 : index
    %c0_8 = arith.constant 0 : index
    %7 = vector.load %arg5[%c0_7, %c0_8] : memref<128x384xbf16, #tpu.memory_space<vmem>>, vector<128x384xbf16>
    %cst_9 = arith.constant dense<0.000000e+00> : vector<16x384xf32>
    %8 = tpu.matmul %4, %7, %cst_9 {dimension_numbers = #tpu.dot_dimension_numbers<[1], [0], [0], [1], [0, 0, 1, 1], [], []>} : vector<16x128xbf16>, vector<128x384xbf16>, vector<16x384xf32> -> vector<16x384xf32>
    %9 = vector.extract_strided_slice %6 {offsets = [0, 0], sizes = [16, 128], strides = [1, 1]} : vector<16x384xf32> to vector<16x128xf32>
    %10 = arith.truncf %9 : vector<16x128xf32> to vector<16x128xbf16>
    %11 = vector.shape_cast %10 : vector<16x128xbf16> to vector<1x16x128xbf16>
    %12 = vector.extract_strided_slice %6 {offsets = [0, 128], sizes = [16, 128], strides = [1, 1]} : vector<16x384xf32> to vector<16x128xf32>
    %13 = arith.truncf %12 : vector<16x128xf32> to vector<16x128xbf16>
    %14 = vector.shape_cast %13 : vector<16x128xbf16> to vector<1x16x128xbf16>
    %15 = vector.extract_strided_slice %6 {offsets = [0, 256], sizes = [16, 128], strides = [1, 1]} : vector<16x384xf32> to vector<16x128xf32>
    %16 = arith.truncf %15 : vector<16x128xf32> to vector<16x128xbf16>
    %17 = vector.shape_cast %16 : vector<16x128xbf16> to vector<1x16x128xbf16>
    %18 = vector.extract_strided_slice %8 {offsets = [0, 0], sizes = [16, 128], strides = [1, 1]} : vector<16x384xf32> to vector<16x128xf32>
    %19 = arith.truncf %18 : vector<16x128xf32> to vector<16x128xbf16>
    %20 = vector.shape_cast %19 : vector<16x128xbf16> to vector<1x16x128xbf16>
    %21 = vector.extract_strided_slice %8 {offsets = [0, 128], sizes = [16, 128], strides = [1, 1]} : vector<16x384xf32> to vector<16x128xf32>
    %22 = arith.truncf %21 : vector<16x128xf32> to vector<16x128xbf16>
    %23 = vector.shape_cast %22 : vector<16x128xbf16> to vector<1x16x128xbf16>
    %24 = vector.extract_strided_slice %8 {offsets = [0, 256], sizes = [16, 128], strides = [1, 1]} : vector<16x384xf32> to vector<16x128xf32>
    %25 = arith.truncf %24 : vector<16x128xf32> to vector<16x128xbf16>
    %26 = vector.shape_cast %25 : vector<16x128xbf16> to vector<1x16x128xbf16>
    %27 = tpu.concatenate %23, %14 in 1 : vector<1x16x128xbf16>, vector<1x16x128xbf16> -> vector<1x32x128xbf16>
    %28 = tpu.concatenate %26, %17 in 1 : vector<1x16x128xbf16>, vector<1x16x128xbf16> -> vector<1x32x128xbf16>
    %cst_10 = arith.constant dense<0.000000e+00> : vector<1x16x32xf32>
    %29 = tpu.matmul %11, %27, %cst_10 {dimension_numbers = #tpu.dot_dimension_numbers<[2], [2], [1], [1], [0, 0, 0, 1, 1, 1], [0], [0]>} : vector<1x16x128xbf16>, vector<1x32x128xbf16>, vector<1x16x32xf32> -> vector<1x16x32xf32>
    %cst_11 = arith.constant dense<0xFF800000> : vector<1x16xf32>
    %30 = vector.multi_reduction <maximumf>, %29, %cst_11 [2] : vector<1x16x32xf32> to vector<1x16xf32>
    %31 = vector.shape_cast %30 : vector<1x16xf32> to vector<1x16x1xf32>
    %32 = vector.broadcast %31 : vector<1x16x1xf32> to vector<1x16x32xf32>
    %33 = arith.subf %29, %32 : vector<1x16x32xf32>
    %34 = math.exp %33 : vector<1x16x32xf32>
    %cst_12 = arith.constant dense<0.000000e+00> : vector<1x16xf32>
    %35 = vector.multi_reduction <add>, %34, %cst_12 [2] : vector<1x16x32xf32> to vector<1x16xf32>
    %36 = vector.shape_cast %35 : vector<1x16xf32> to vector<1x16x1xf32>
    %37 = tpu.reciprocal %36 {approx = true} : vector<1x16x1xf32> -> vector<1x16x1xf32>
    %38 = arith.truncf %34 : vector<1x16x32xf32> to vector<1x16x32xbf16>
    %cst_13 = arith.constant dense<0.000000e+00> : vector<1x16x128xf32>
    %39 = tpu.matmul %38, %28, %cst_13 {dimension_numbers = #tpu.dot_dimension_numbers<[2], [1], [1], [2], [0, 0, 0, 1, 1, 2], [0], [0]>} : vector<1x16x32xbf16>, vector<1x32x128xbf16>, vector<1x16x128xf32> -> vector<1x16x128xf32>
    %40 = vector.broadcast %37 : vector<1x16x1xf32> to vector<1x16x128xf32>
    %41 = arith.mulf %39, %40 : vector<1x16x128xf32>
    %42 = vector.shape_cast %41 : vector<1x16x128xf32> to vector<16x128xf32>
    %43 = arith.truncf %42 : vector<16x128xf32> to vector<16x128xbf16>
    %c0_14 = arith.constant 0 : index
    %c0_15 = arith.constant 0 : index
    %44 = vector.load %arg4[%c0_14, %c0_15] : memref<128x128xbf16, #tpu.memory_space<vmem>>, vector<128x128xbf16>
    %cst_16 = arith.constant dense<0.000000e+00> : vector<16x128xf32>
    %45 = tpu.matmul %43, %44, %cst_16 {dimension_numbers = #tpu.dot_dimension_numbers<[1], [0], [0], [1], [0, 0, 1, 1], [], []>} : vector<16x128xbf16>, vector<128x128xbf16>, vector<16x128xf32> -> vector<16x128xf32>
    %cst_17 = arith.constant dense<0.000000e+00> : vector<1x16x16xf32>
    %46 = tpu.matmul %20, %14, %cst_17 {dimension_numbers = #tpu.dot_dimension_numbers<[2], [2], [1], [1], [0, 0, 0, 1, 1, 1], [0], [0]>} : vector<1x16x128xbf16>, vector<1x16x128xbf16>, vector<1x16x16xf32> -> vector<1x16x16xf32>
    %cst_18 = arith.constant dense<0xFF800000> : vector<1x16xf32>
    %47 = vector.multi_reduction <maximumf>, %46, %cst_18 [2] : vector<1x16x16xf32> to vector<1x16xf32>
    %48 = vector.shape_cast %47 : vector<1x16xf32> to vector<1x16x1xf32>
    %49 = vector.broadcast %48 : vector<1x16x1xf32> to vector<1x16x16xf32>
    %50 = arith.subf %46, %49 : vector<1x16x16xf32>
    %51 = math.exp %50 : vector<1x16x16xf32>
    %cst_19 = arith.constant dense<0.000000e+00> : vector<1x16xf32>
    %52 = vector.multi_reduction <add>, %51, %cst_19 [2] : vector<1x16x16xf32> to vector<1x16xf32>
    %53 = vector.shape_cast %52 : vector<1x16xf32> to vector<1x16x1xf32>
    %54 = tpu.reciprocal %53 {approx = true} : vector<1x16x1xf32> -> vector<1x16x1xf32>
    %55 = arith.truncf %51 : vector<1x16x16xf32> to vector<1x16x16xbf16>
    %cst_20 = arith.constant dense<0.000000e+00> : vector<1x16x128xf32>
    %56 = tpu.matmul %55, %17, %cst_20 {dimension_numbers = #tpu.dot_dimension_numbers<[2], [1], [1], [2], [0, 0, 0, 1, 1, 2], [0], [0]>} : vector<1x16x16xbf16>, vector<1x16x128xbf16>, vector<1x16x128xf32> -> vector<1x16x128xf32>
    %57 = vector.broadcast %54 : vector<1x16x1xf32> to vector<1x16x128xf32>
    %58 = arith.mulf %56, %57 : vector<1x16x128xf32>
    %59 = vector.shape_cast %58 : vector<1x16x128xf32> to vector<16x128xf32>
    %60 = arith.truncf %59 : vector<16x128xf32> to vector<16x128xbf16>
    %c0_21 = arith.constant 0 : index
    %c0_22 = arith.constant 0 : index
    %61 = vector.load %arg6[%c0_21, %c0_22] : memref<128x128xbf16, #tpu.memory_space<vmem>>, vector<128x128xbf16>
    %cst_23 = arith.constant dense<0.000000e+00> : vector<16x128xf32>
    %62 = tpu.matmul %60, %61, %cst_23 {dimension_numbers = #tpu.dot_dimension_numbers<[1], [0], [0], [1], [0, 0, 1, 1], [], []>} : vector<16x128xbf16>, vector<128x128xbf16>, vector<16x128xf32> -> vector<16x128xf32>
    %63 = vector.shape_cast %62 : vector<16x128xf32> to vector<1x16x128xf32>
    %c0_24 = arith.constant 0 : index
    %c0_25 = arith.constant 0 : index
    %c0_26 = arith.constant 0 : index
    %64 = vector.load %arg10[%c0_24, %c0_25, %c0_26] : memref<1x16x128xf32, #tpu.memory_space<vmem>>, vector<1x16x128xf32>
    tpu.vector_store %arg10[%c0_24, %c0_25, %c0_26], %63 {strides = array<i32>} : memref<1x16x128xf32, #tpu.memory_space<vmem>>, vector<1x16x128xf32>,
    %cst_27 = arith.constant dense<0.000000e+00> : vector<16xf32>
    %65 = vector.multi_reduction <add>, %45, %cst_27 [1] : vector<16x128xf32> to vector<16xf32>
    %66 = vector.shape_cast %65 : vector<16xf32> to vector<16x1xf32>
    %cst_28 = arith.constant 1.280000e+02 : f32
    %67 = vector.broadcast %cst_28 : f32 to vector<16x1xf32>
    %68 = arith.divf %66, %67 : vector<16x1xf32>
    %69 = vector.broadcast %68 : vector<16x1xf32> to vector<16x128xf32>
    %70 = arith.subf %45, %69 : vector<16x128xf32>
    %71 = arith.mulf %70, %70 : vector<16x128xf32>
    %cst_29 = arith.constant dense<0.000000e+00> : vector<16xf32>
    %72 = vector.multi_reduction <add>, %71, %cst_29 [1] : vector<16x128xf32> to vector<16xf32>
    %73 = vector.shape_cast %72 : vector<16xf32> to vector<16x1xf32>
    %cst_30 = arith.constant 1.280000e+02 : f32
    %74 = vector.broadcast %cst_30 : f32 to vector<16x1xf32>
    %75 = arith.divf %73, %74 : vector<16x1xf32>
    %cst_31 = arith.constant 9.99999974E-6 : f32
    %76 = vector.broadcast %cst_31 : f32 to vector<16x1xf32>
    %77 = arith.addf %75, %76 : vector<16x1xf32>
    %78 = math.rsqrt %77 : vector<16x1xf32>
    %79 = vector.broadcast %78 : vector<16x1xf32> to vector<16x128xf32>
    %80 = arith.mulf %70, %79 : vector<16x128xf32>
    %c0_32 = arith.constant 0 : index
    %c0_33 = arith.constant 0 : index
    %81 = vector.load %arg7[%c0_32, %c0_33] : memref<1x128xf32, #tpu.memory_space<vmem>>, vector<1x128xf32>
    %82 = vector.broadcast %81 : vector<1x128xf32> to vector<16x128xf32>
    %83 = arith.mulf %80, %82 : vector<16x128xf32>
    %c0_34 = arith.constant 0 : index
    %c0_35 = arith.constant 0 : index
    %84 = vector.load %arg8[%c0_34, %c0_35] : memref<1x128xf32, #tpu.memory_space<vmem>>, vector<1x128xf32>
    %85 = vector.broadcast %84 : vector<1x128xf32> to vector<16x128xf32>
    %86 = arith.addf %83, %85 : vector<16x128xf32>
    %87 = arith.truncf %86 : vector<16x128xf32> to vector<16x128xbf16>
    %c0_36 = arith.constant 0 : index
    %c0_37 = arith.constant 0 : index
    %88 = vector.load %arg9[%c0_36, %c0_37] : memref<16x128xbf16, #tpu.memory_space<vmem>>, vector<16x128xbf16>
    tpu.vector_store %arg9[%c0_36, %c0_37], %87 {strides = array<i32>} : memref<16x128xbf16, #tpu.memory_space<vmem>>, vector<16x128xbf16>,
    return
  }
  func.func @transform_0(%arg0: i32) -> (i32, i32, i32) {
    %c0_i32 = arith.constant 0 : i32
    %c0_i32_0 = arith.constant 0 : i32
    %c0_i32_1 = arith.constant 0 : i32
    return %arg0, %c0_i32, %c0_i32_0 : i32, i32, i32
  }
  func.func @transform_1(%arg0: i32) -> (i32, i32, i32) {
    %c0_i32 = arith.constant 0 : i32
    %c0_i32_0 = arith.constant 0 : i32
    %c0_i32_1 = arith.constant 0 : i32
    return %arg0, %c0_i32, %c0_i32_0 : i32, i32, i32
  }
  func.func @transform_2(%arg0: i32) -> (i32, i32) {
    %c0_i32 = arith.constant 0 : i32
    %c0_i32_0 = arith.constant 0 : i32
    %c0_i32_1 = arith.constant 0 : i32
    return %c0_i32, %c0_i32_0 : i32, i32
  }
  func.func @transform_3(%arg0: i32) -> (i32, i32) {
    %c0_i32 = arith.constant 0 : i32
    %c0_i32_0 = arith.constant 0 : i32
    %c0_i32_1 = arith.constant 0 : i32
    return %c0_i32, %c0_i32_0 : i32, i32
  }
  func.func @transform_4(%arg0: i32) -> (i32, i32) {
    %c0_i32 = arith.constant 0 : i32
    %c0_i32_0 = arith.constant 0 : i32
    %c0_i32_1 = arith.constant 0 : i32
    return %c0_i32, %c0_i32_0 : i32, i32
  }
  func.func @transform_5(%arg0: i32) -> (i32, i32) {
    %c0_i32 = arith.constant 0 : i32
    %c0_i32_0 = arith.constant 0 : i32
    %c0_i32_1 = arith.constant 0 : i32
    return %c0_i32, %c0_i32_0 : i32, i32
  }
  func.func @transform_6(%arg0: i32) -> (i32, i32) {
    %c0_i32 = arith.constant 0 : i32
    %c0_i32_0 = arith.constant 0 : i32
    %c0_i32_1 = arith.constant 0 : i32
    return %c0_i32, %c0_i32_0 : i32, i32
  }
  func.func @transform_7(%arg0: i32) -> (i32, i32) {
    %c0_i32 = arith.constant 0 : i32
    %c0_i32_0 = arith.constant 0 : i32
    %c0_i32_1 = arith.constant 0 : i32
    return %c0_i32, %c0_i32_0 : i32, i32
  }
  func.func @transform_8(%arg0: i32) -> (i32, i32) {
    %c0_i32 = arith.constant 0 : i32
    %c0_i32_0 = arith.constant 0 : i32
    return %arg0, %c0_i32 : i32, i32
  }
  func.func @transform_9(%arg0: i32) -> (i32, i32, i32) {
    %c0_i32 = arith.constant 0 : i32
    %c0_i32_0 = arith.constant 0 : i32
    %c0_i32_1 = arith.constant 0 : i32
    return %arg0, %c0_i32, %c0_i32_0 : i32, i32, i32
  }
}

</mosaic_0001>

<llo_original>
// kernel: tpu_custom_call.1
$region0: #{tpu_custom_call.1}
  #allocation0 [shape = 'u32[]', space=smem, size = 0x4, offset = 0x4, fixed_abs, tag = 'smem constant byte address 0x4 - core index']
  #allocation1 [shape = 'u32[144,128]{1,0:T(1,128)}', space=vmem, size = 0x12000, scoped, tag = 'internal scratch']
  %s0 = inlined_call_operand.vmem [shape: bf16[2,16,128], index: 0, kind: input, shape index: {}]
  %s1 = inlined_call_operand.hbm [shape: f32[2,16,128], index: 1, kind: input, shape index: {}, may-alias: {1,9}]
  %s2 = inlined_call_operand.hbm [shape: bf16[128,384], index: 2, kind: input, shape index: {}]
  %s3 = inlined_call_operand.vmem [shape: bf16[128,128], index: 3, kind: input, shape index: {}]
  %s4 = inlined_call_operand.hbm [shape: bf16[128,384], index: 4, kind: input, shape index: {}]
  %s5 = inlined_call_operand.hbm [shape: bf16[128,128], index: 5, kind: input, shape index: {}]
  %s6 = inlined_call_operand.vmem [shape: f32[1,128], index: 6, kind: input, shape index: {}]
  %s7 = inlined_call_operand.vmem [shape: f32[1,128], index: 7, kind: input, shape index: {}]
  %s8 = inlined_call_operand.hbm [shape: bf16[32,128], index: 8, kind: output, shape index: {0}]
  %s9 = inlined_call_operand.hbm [shape: f32[2,16,128], index: 9, kind: output, shape index: {1}, may-alias: {1,9}]
  %10 = xla_tuple %s8, %s9
  %s11 = sld [smem:[#allocation0]]
  $region89: #{tpu_custom_call.1} parent=0
    _
  %s13 = ssub.s32 1, %s11
  %s14 = scalar_select 0, %s13, %s11
  $region1: #{tpu_custom_call.1} parent=0
    #allocation2 [shape = 'u8[16384]{0}', space=vmem, size = 0x4000, scoped, tag = 'input window, operand 1']
    #allocation3 [shape = 's32[2]{0}', space=sflag, size = 0x8, scoped, tag = 'scoped memory for tpu_custom_call.1']
    #allocation4 [shape = 's32[2]{0}', space=sflag, size = 0x8, scoped, tag = 'scoped memory for tpu_custom_call.1']
    #allocation5 [shape = 'u8[98304]{0}', space=vmem, size = 0x18000, scoped, tag = 'input window, operand 2, single buffered']
    #allocation6 [shape = 's32[1]{0}', space=sflag, size = 0x4, scoped, tag = 'scoped memory for tpu_custom_call.1']
    #allocation7 [shape = 'u8[98304]{0}', space=vmem, size = 0x18000, scoped, tag = 'input window, operand 4, single buffered']
    #allocation8 [shape = 'u8[32768]{0}', space=vmem, size = 0x8000, scoped, tag = 'input window, operand 5, single buffered']
    #allocation9 [shape = 's32[1]{0}', space=sflag, size = 0x4, scoped, tag = 'scoped memory for tpu_custom_call.1']
    #allocation10 [shape = 'u8[8192]{0}', space=vmem, size = 0x2000, scoped, tag = 'output window, operand 0']
    #allocation11 [shape = 'u8[16384]{0}', space=vmem, size = 0x4000, scoped, tag = 'output window, operand 1']
    #allocation12 [shape = 's32[2]{0}', space=sflag, size = 0x8, scoped, tag = 'scoped memory for tpu_custom_call.1']
    %15 = vsyncpa [#allocation3], 0
    %s16 = scalar_lea.sflag [#allocation3], 1
    %17 = vsyncpa %s16, 0
    %18 = vsyncpa [#allocation6], 0
    %19 = vsyncpa [#allocation9], 0
    %20 = vsyncpa [#allocation4], 0
    %s21 = scalar_lea.sflag [#allocation4], 1
    %22 = vsyncpa %s21, 0
    %23 = vsyncpa [#allocation12], 0
    %s24 = scalar_lea.sflag [#allocation12], 1
    %25 = vsyncpa %s24, 0
    loop: start=0, step=1, limit=4
    $region2: #{tpu_custom_call.1} parent=1 // loop_pre_header
      _
    $region3: #{tpu_custom_call.1} parent=1 // loop_header
      %s27 = sphi 0, %s31
      %p28 = scmp.ge.s32.totalorder %s27, 4
      %s37 = sphi 0, %s39
      %s40 = sphi 0, %s37
      %s41 = sphi 0, %s40
      %s57 = sphi 0, %s41
      %s63 = sphi 0, %s65
      %s66 = sphi 0, %s63
      %s67 = sphi 0, %s66
      %s83 = sphi 0, %s67
      %s87 = sphi 0, %s87
      %s89 = sphi 0, %s87
      %s90 = sphi 0, %s89
      %s104 = sphi 0, %s90
      %s108 = sphi 0, %s108
      %s110 = sphi 0, %s108
      %s111 = sphi 0, %s110
      %s125 = sphi 0, %s111
      %s129 = sphi 0, %s129
      %s131 = sphi 0, %s129
      %s132 = sphi 0, %s131
      %s146 = sphi 0, %s132
      %s150 = sphi 0, %s150
      %s152 = sphi 0, %s150
      %s153 = sphi 0, %s152
      %s167 = sphi 0, %s153
      %s171 = sphi 0, %s171
      %s173 = sphi 0, %s171
      %s174 = sphi 0, %s173
      %s188 = sphi 0, %s174
      %s192 = sphi 0, %s192
      %s194 = sphi 0, %s192
      %s195 = sphi 0, %s194
      %s209 = sphi 0, %s195
      %s215 = sphi 0, %s217
      %s218 = sphi 0, %s215
      %s219 = sphi 0, %s218
      %s235 = sphi 0, %s219
      %s241 = sphi 0, %s243
      %s244 = sphi 0, %s241
      %s245 = sphi 0, %s244
      %s261 = sphi 0, %s245
    $region4: #{tpu_custom_call.1} parent=1 // loop_header_branch
      %30 = sbr.rel (%p28) target = $region8
    $region5: #{tpu_custom_call.1} parent=1 // loop_body
      %s32 = ssub.s32 %s27, 1
      %s33 = ssub.s32 %s27, 2
      %s34 = sadd.s32 %s27, 1
      %s35 = ssub.s32 %s27, %s34
      %p36 = scmp.eq.s32.totalorder %s35, 0
      %s38 = sadd.s32 %s37, 1
      %s39 = scalar_select %p36, %s37, %s38
      %p42 = pneg %p36
      %p43 = scmp.eq.s32.totalorder %s27, 1
      %p44 = por %p42, %p43
      %p45 = scmp.ne.s32.totalorder %s37, %s40
      %p46 = scmp.eq.s32.totalorder %s27, 0
      %p47 = por %p45, %p46
      %p48 = scmp.ne.s32.totalorder %s37, %s40
      %p49 = scmp.eq.s32.totalorder %s32, 1
      %p50 = por %p48, %p49
      %p51 = scmp.ne.s32.totalorder %s40, %s41
      %p52 = scmp.eq.s32.totalorder %s32, 0
      %p53 = por %p51, %p52
      %p54 = scmp.ne.s32.totalorder %s40, %s41
      %p55 = scmp.eq.s32.totalorder %s33, 1
      %p56 = por %p54, %p55
      %p58 = scmp.ne.s32.totalorder %s41, %s57
      %p59 = scmp.eq.s32.totalorder %s33, 0
      %p60 = por %p58, %p59
      %s61 = ssub.s32 %s27, %s34
      %p62 = scmp.eq.s32.totalorder %s61, 0
      %s64 = sadd.s32 %s63, 1
      %s65 = scalar_select %p62, %s63, %s64
      %p68 = pneg %p62
      %p69 = scmp.eq.s32.totalorder %s27, 1
      %p70 = por %p68, %p69
      %p71 = scmp.ne.s32.totalorder %s63, %s66
      %p72 = scmp.eq.s32.totalorder %s27, 0
      %p73 = por %p71, %p72
      %p74 = scmp.ne.s32.totalorder %s63, %s66
      %p75 = scmp.eq.s32.totalorder %s32, 1
      %p76 = por %p74, %p75
      %p77 = scmp.ne.s32.totalorder %s66, %s67
      %p78 = scmp.eq.s32.totalorder %s32, 0
      %p79 = por %p77, %p78
      %p80 = scmp.ne.s32.totalorder %s66, %s67
      %p81 = scmp.eq.s32.totalorder %s33, 1
      %p82 = por %p80, %p81
      %p84 = scmp.ne.s32.totalorder %s67, %s83
      %p85 = scmp.eq.s32.totalorder %s33, 0
      %p86 = por %p84, %p85
      %s88 = sadd.s32 %s87, 1
      %p91 = scmp.eq.s32.totalorder %s27, 1
      %p92 = scmp.ne.s32.totalorder %s87, %s89
      %p93 = scmp.eq.s32.totalorder %s27, 0
      %p94 = por %p92, %p93
      %p95 = scmp.ne.s32.totalorder %s87, %s89
      %p96 = scmp.eq.s32.totalorder %s32, 1
      %p97 = por %p95, %p96
      %p98 = scmp.ne.s32.totalorder %s89, %s90
      %p99 = scmp.eq.s32.totalorder %s32, 0
      %p100 = por %p98, %p99
      %p101 = scmp.ne.s32.totalorder %s89, %s90
      %p102 = scmp.eq.s32.totalorder %s33, 1
      %p103 = por %p101, %p102
      %p105 = scmp.ne.s32.totalorder %s90, %s104
      %p106 = scmp.eq.s32.totalorder %s33, 0
      %p107 = por %p105, %p106
      %s109 = sadd.s32 %s108, 1
      %p112 = scmp.eq.s32.totalorder %s27, 1
      %p113 = scmp.ne.s32.totalorder %s108, %s110
      %p114 = scmp.eq.s32.totalorder %s27, 0
      %p115 = por %p113, %p114
      %p116 = scmp.ne.s32.totalorder %s108, %s110
      %p117 = scmp.eq.s32.totalorder %s32, 1
      %p118 = por %p116, %p117
      %p119 = scmp.ne.s32.totalorder %s110, %s111
      %p120 = scmp.eq.s32.totalorder %s32, 0
      %p121 = por %p119, %p120
      %p122 = scmp.ne.s32.totalorder %s110, %s111
      %p123 = scmp.eq.s32.totalorder %s33, 1
      %p124 = por %p122, %p123
      %p126 = scmp.ne.s32.totalorder %s111, %s125
      %p127 = scmp.eq.s32.totalorder %s33, 0
      %p128 = por %p126, %p127
      %s130 = sadd.s32 %s129, 1
      %p133 = scmp.eq.s32.totalorder %s27, 1
      %p134 = scmp.ne.s32.totalorder %s129, %s131
      %p135 = scmp.eq.s32.totalorder %s27, 0
      %p136 = por %p134, %p135
      %p137 = scmp.ne.s32.totalorder %s129, %s131
      %p138 = scmp.eq.s32.totalorder %s32, 1
      %p139 = por %p137, %p138
      %p140 = scmp.ne.s32.totalorder %s131, %s132
      %p141 = scmp.eq.s32.totalorder %s32, 0
      %p142 = por %p140, %p141
      %p143 = scmp.ne.s32.totalorder %s131, %s132
      %p144 = scmp.eq.s32.totalorder %s33, 1
      %p145 = por %p143, %p144
      %p147 = scmp.ne.s32.totalorder %s132, %s146
      %p148 = scmp.eq.s32.totalorder %s33, 0
      %p149 = por %p147, %p148
      %s151 = sadd.s32 %s150, 1
      %p154 = scmp.eq.s32.totalorder %s27, 1
      %p155 = scmp.ne.s32.totalorder %s150, %s152
      %p156 = scmp.eq.s32.totalorder %s27, 0
      %p157 = por %p155, %p156
      %p158 = scmp.ne.s32.totalorder %s150, %s152
      %p159 = scmp.eq.s32.totalorder %s32, 1
      %p160 = por %p158, %p159
      %p161 = scmp.ne.s32.totalorder %s152, %s153
      %p162 = scmp.eq.s32.totalorder %s32, 0
      %p163 = por %p161, %p162
      %p164 = scmp.ne.s32.totalorder %s152, %s153
      %p165 = scmp.eq.s32.totalorder %s33, 1
      %p166 = por %p164, %p165
      %p168 = scmp.ne.s32.totalorder %s153, %s167
      %p169 = scmp.eq.s32.totalorder %s33, 0
      %p170 = por %p168, %p169
      %s172 = sadd.s32 %s171, 1
      %p175 = scmp.eq.s32.totalorder %s27, 1
      %p176 = scmp.ne.s32.totalorder %s171, %s173
      %p177 = scmp.eq.s32.totalorder %s27, 0
      %p178 = por %p176, %p177
      %p179 = scmp.ne.s32.totalorder %s171, %s173
      %p180 = scmp.eq.s32.totalorder %s32, 1
      %p181 = por %p179, %p180
      %p182 = scmp.ne.s32.totalorder %s173, %s174
      %p183 = scmp.eq.s32.totalorder %s32, 0
      %p184 = por %p182, %p183
      %p185 = scmp.ne.s32.totalorder %s173, %s174
      %p186 = scmp.eq.s32.totalorder %s33, 1
      %p187 = por %p185, %p186
      %p189 = scmp.ne.s32.totalorder %s174, %s188
      %p190 = scmp.eq.s32.totalorder %s33, 0
      %p191 = por %p189, %p190
      %s193 = sadd.s32 %s192, 1
      %p196 = scmp.eq.s32.totalorder %s27, 1
      %p197 = scmp.ne.s32.totalorder %s192, %s194
      %p198 = scmp.eq.s32.totalorder %s27, 0
      %p199 = por %p197, %p198
      %p200 = scmp.ne.s32.totalorder %s192, %s194
      %p201 = scmp.eq.s32.totalorder %s32, 1
      %p202 = por %p200, %p201
      %p203 = scmp.ne.s32.totalorder %s194, %s195
      %p204 = scmp.eq.s32.totalorder %s32, 0
      %p205 = por %p203, %p204
      %p206 = scmp.ne.s32.totalorder %s194, %s195
      %p207 = scmp.eq.s32.totalorder %s33, 1
      %p208 = por %p206, %p207
      %p210 = scmp.ne.s32.totalorder %s195, %s209
      %p211 = scmp.eq.s32.totalorder %s33, 0
      %p212 = por %p210, %p211
      %s213 = ssub.s32 %s27, %s34
      %p214 = scmp.eq.s32.totalorder %s213, 0
      %s216 = sadd.s32 %s215, 1
      %s217 = scalar_select %p214, %s215, %s216
      %p220 = pneg %p214
      %p221 = scmp.eq.s32.totalorder %s27, 1
      %p222 = por %p220, %p221
      %p223 = scmp.ne.s32.totalorder %s215, %s218
      %p224 = scmp.eq.s32.totalorder %s27, 0
      %p225 = por %p223, %p224
      %p226 = scmp.ne.s32.totalorder %s215, %s218
      %p227 = scmp.eq.s32.totalorder %s32, 1
      %p228 = por %p226, %p227
      %p229 = scmp.ne.s32.totalorder %s218, %s219
      %p230 = scmp.eq.s32.totalorder %s32, 0
      %p231 = por %p229, %p230
      %p232 = scmp.ne.s32.totalorder %s218, %s219
      %p233 = scmp.eq.s32.totalorder %s33, 1
      %p234 = por %p232, %p233
      %p236 = scmp.ne.s32.totalorder %s219, %s235
      %p237 = scmp.eq.s32.totalorder %s33, 0
      %p238 = por %p236, %p237
      %s239 = ssub.s32 %s27, %s34
      %p240 = scmp.eq.s32.totalorder %s239, 0
      %s242 = sadd.s32 %s241, 1
      %s243 = scalar_select %p240, %s241, %s242
      %p246 = pneg %p240
      %p247 = scmp.eq.s32.totalorder %s27, 1
      %p248 = por %p246, %p247
      %p249 = scmp.ne.s32.totalorder %s241, %s244
      %p250 = scmp.eq.s32.totalorder %s27, 0
      %p251 = por %p249, %p250
      %p252 = scmp.ne.s32.totalorder %s241, %s244
      %p253 = scmp.eq.s32.totalorder %s32, 1
      %p254 = por %p252, %p253
      %p255 = scmp.ne.s32.totalorder %s244, %s245
      %p256 = scmp.eq.s32.totalorder %s32, 0
      %p257 = por %p255, %p256
      %p258 = scmp.ne.s32.totalorder %s244, %s245
      %p259 = scmp.eq.s32.totalorder %s33, 1
      %p260 = por %p258, %p259
      %p262 = scmp.ne.s32.totalorder %s245, %s261
      %p263 = scmp.eq.s32.totalorder %s33, 0
      %p264 = por %p262, %p263
      %p265 = scmp.le.s32.totalorder 1, %s27
      %p266 = scmp.lt.s32.totalorder %s27, 3
      %p267 = pnand %p265, %p266
      %p268 = pneg %p267
      // Predicated region
      $region9: #{tpu_custom_call.1} parent=5 // pred_check
        _
      $region10: #{tpu_custom_call.1} parent=5 // pred_check_branch
        %270 = sbr.rel (%p267) target = $region12
      $region11: #{tpu_custom_call.1} parent=5 // pred_region
        %s271 = ssub.s32 %s27, 1
        // Predicated region
        $region13: #{tpu_custom_call.1} parent=11 // pred_check
          %p272 = pneg %p100
        $region14: #{tpu_custom_call.1} parent=11 // pred_check_branch
          %274 = sbr.rel (%p272) target = $region16
        $region15: #{tpu_custom_call.1} parent=11 // pred_region
          %s276 = ssub.s32 3072, 3072
          %277 = vsyncadd [#allocation6], %s276
          %s278 = sshll.u32 [#allocation5], 4
          %s279 = int_to_ptr.vmem [resolvable:$true] %s278
          %284 = dma.hbm_to_vmem [thread:$0]  %s2, 3072, %s279, [#allocation6], 192, 192, 12
        $region16: #{tpu_custom_call.1} parent=11 // pred_fallthru
          _
        // Predicated region
        $region17: #{tpu_custom_call.1} parent=11 // pred_check
          %p285 = pneg %p121
        $region18: #{tpu_custom_call.1} parent=11 // pred_check_branch
          %287 = sbr.rel (%p285) target = $region20
        $region19: #{tpu_custom_call.1} parent=11 // pred_region
          _
        $region20: #{tpu_custom_call.1} parent=11 // pred_fallthru
          _
        // Predicated region
        $region21: #{tpu_custom_call.1} parent=11 // pred_check
          %p288 = pneg %p142
        $region22: #{tpu_custom_call.1} parent=11 // pred_check_branch
          %290 = sbr.rel (%p288) target = $region24
        $region23: #{tpu_custom_call.1} parent=11 // pred_region
          %s292 = ssub.s32 3072, 3072
          %293 = vsyncadd [#allocation6], %s292
          %s294 = sshll.u32 [#allocation7], 4
          %s295 = int_to_ptr.vmem [resolvable:$true] %s294
          %300 = dma.hbm_to_vmem [thread:$0]  %s4, 3072, %s295, [#allocation6], 192, 192, 12
        $region24: #{tpu_custom_call.1} parent=11 // pred_fallthru
          _
        // Predicated region
        $region25: #{tpu_custom_call.1} parent=11 // pred_check
          %p301 = pneg %p163
        $region26: #{tpu_custom_call.1} parent=11 // pred_check_branch
          %303 = sbr.rel (%p301) target = $region28
        $region27: #{tpu_custom_call.1} parent=11 // pred_region
          %s305 = ssub.s32 1024, 1024
          %306 = vsyncadd [#allocation9], %s305
          %s307 = sshll.u32 [#allocation8], 4
          %s308 = int_to_ptr.vmem [resolvable:$true] %s307
          %313 = dma.hbm_to_vmem [thread:$0]  %s5, 1024, %s308, [#allocation9], 64, 64, 4
        $region28: #{tpu_custom_call.1} parent=11 // pred_fallthru
          _
        // Predicated region
        $region29: #{tpu_custom_call.1} parent=11 // pred_check
          %p314 = pneg %p184
        $region30: #{tpu_custom_call.1} parent=11 // pred_check_branch
          %316 = sbr.rel (%p314) target = $region32
        $region31: #{tpu_custom_call.1} parent=11 // pred_region
          _
        $region32: #{tpu_custom_call.1} parent=11 // pred_fallthru
          _
        // Predicated region
        $region33: #{tpu_custom_call.1} parent=11 // pred_check
          %p317 = pneg %p205
        $region34: #{tpu_custom_call.1} parent=11 // pred_check_branch
          %319 = sbr.rel (%p317) target = $region36
        $region35: #{tpu_custom_call.1} parent=11 // pred_region
          _
        $region36: #{tpu_custom_call.1} parent=11 // pred_fallthru
          _
      $region12: #{tpu_custom_call.1} parent=5 // pred_fallthru
        _
      %p320 = scmp.lt.s32.totalorder %s27, 2
      // Predicated region
      $region37: #{tpu_custom_call.1} parent=5 // pred_check
        %p321 = pneg %p320
      $region38: #{tpu_custom_call.1} parent=5 // pred_check_branch
        %323 = sbr.rel (%p321) target = $region40
      $region39: #{tpu_custom_call.1} parent=5 // pred_region
        // Predicated region
        $region41: #{tpu_custom_call.1} parent=39 // pred_check
          %p324 = pneg %p47
        $region42: #{tpu_custom_call.1} parent=39 // pred_check_branch
          %326 = sbr.rel (%p324) target = $region44
        $region43: #{tpu_custom_call.1} parent=39 // pred_region
          %p327 = scmp.lt.s32.totalorder %s27, 1
          %s328 = scalar_select %p327, %s27, 1
          %s329 = smul.addr %s328, 2
          %s330 = smul.addr %s329, 4
          %s331 = scalar_lea.vmem %s0, %s330
        $region44: #{tpu_custom_call.1} parent=39 // pred_fallthru
          _
        // Predicated region
        $region45: #{tpu_custom_call.1} parent=39 // pred_check
          %p332 = pneg %p73
        $region46: #{tpu_custom_call.1} parent=39 // pred_check_branch
          %334 = sbr.rel (%p332) target = $region48
        $region47: #{tpu_custom_call.1} parent=39 // pred_region
          %s335 = sand.u32 %s63, 1
          %s336 = scalar_lea.sflag [#allocation3], %s335
          %s337 = sand.u32 %s63, 1
          %s338 = smul.addr %s337, 16
          %s339 = scalar_lea.vmem [#allocation2], %s338
          %s341 = ssub.s32 256, 256
          %342 = vsyncadd %s336, %s341
          %s343 = smul.addr %s27, 2
          %s344 = smul.addr %s343, 128
          %s345 = scalar_lea.hbm %s1, %s344
          %s346 = sshll.u32 %s339, 4
          %s347 = int_to_ptr.vmem [resolvable:$true] %s346
          %352 = dma.hbm_to_vmem [thread:$0]  %s345, 256, %s347, %s336, 128, 128, 8
        $region48: #{tpu_custom_call.1} parent=39 // pred_fallthru
          _
      $region40: #{tpu_custom_call.1} parent=5 // pred_fallthru
        _
      %p353 = scmp.le.s32.totalorder 1, %s27
      %p354 = scmp.lt.s32.totalorder %s27, 3
      %p355 = pnand %p353, %p354
      %p356 = pneg %p355
      // Predicated region
      $region49: #{tpu_custom_call.1} parent=5 // pred_check
        _
      $region50: #{tpu_custom_call.1} parent=5 // pred_check_branch
        %358 = sbr.rel (%p355) target = $region52
      $region51: #{tpu_custom_call.1} parent=5 // pred_region
        %s359 = ssub.s32 %s27, 1
        %s360 = sand.u32 %s66, 1
        %s361 = scalar_lea.sflag [#allocation3], %s360
        %s362 = sand.u32 %s66, 1
        %s363 = smul.addr %s362, 16
        %s364 = scalar_lea.vmem [#allocation2], %s363
        // Predicated region
        $region53: #{tpu_custom_call.1} parent=51 // pred_check
          %p365 = pneg %p79
        $region54: #{tpu_custom_call.1} parent=51 // pred_check_branch
          %367 = sbr.rel (%p365) target = $region56
        $region55: #{tpu_custom_call.1} parent=51 // pred_region
          %368 = dma.done %s361, 256
        $region56: #{tpu_custom_call.1} parent=51 // pred_fallthru
          _
        // Predicated region
        $region57: #{tpu_custom_call.1} parent=51 // pred_check
          %p369 = pneg %p100
        $region58: #{tpu_custom_call.1} parent=51 // pred_check_branch
          %371 = sbr.rel (%p369) target = $region60
        $region59: #{tpu_custom_call.1} parent=51 // pred_region
          %372 = dma.done [#allocation6], 3072
        $region60: #{tpu_custom_call.1} parent=51 // pred_fallthru
          _
        // Predicated region
        $region61: #{tpu_custom_call.1} parent=51 // pred_check
          %p373 = pneg %p142
        $region62: #{tpu_custom_call.1} parent=51 // pred_check_branch
          %375 = sbr.rel (%p373) target = $region64
        $region63: #{tpu_custom_call.1} parent=51 // pred_region
          %376 = dma.done [#allocation6], 3072
        $region64: #{tpu_custom_call.1} parent=51 // pred_fallthru
          _
        // Predicated region
        $region65: #{tpu_custom_call.1} parent=51 // pred_check
          %p377 = pneg %p163
        $region66: #{tpu_custom_call.1} parent=51 // pred_check_branch
          %379 = sbr.rel (%p377) target = $region68
        $region67: #{tpu_custom_call.1} parent=51 // pred_region
          %380 = dma.done [#allocation9], 1024
        $region68: #{tpu_custom_call.1} parent=51 // pred_fallthru
          _
        %p381 = scmp.lt.s32.totalorder %s32, 1
        %s382 = scalar_select %p381, %s32, 1
        %s383 = smul.addr %s382, 2
        %s384 = smul.addr %s383, 4
        %s385 = scalar_lea.vmem %s0, %s384
        %p386 = pneg %p53
        %p387 = pneg %p50
        %s388 = sand.u32 %s66, 1
        %s389 = scalar_lea.sflag [#allocation3], %s388
        %s390 = sand.u32 %s66, 1
        %s391 = smul.addr %s390, 16
        %s392 = scalar_lea.vmem [#allocation2], %s391
        %p393 = pneg %p79
        %p394 = pneg %p76
        %p395 = pneg %p100
        %p396 = pneg %p97
        %p397 = pneg %p121
        %p398 = pneg %p118
        %p399 = pneg %p142
        %p400 = pneg %p139
        %p401 = pneg %p163
        %p402 = pneg %p160
        %p403 = pneg %p184
        %p404 = pneg %p181
        %p405 = pneg %p205
        %p406 = pneg %p202
        %p407 = pneg %p231
        %p408 = pneg %p228
        %s409 = sand.u32 %s218, 1
        %s410 = scalar_lea.sflag [#allocation4], %s409
        %s411 = sand.u32 %s218, 1
        %s412 = smul.addr %s411, 8
        %s413 = scalar_lea.vmem [#allocation10], %s412
        %p414 = pneg %p257
        %p415 = pneg %p254
        %s416 = sand.u32 %s244, 1
        %s417 = scalar_lea.sflag [#allocation12], %s416
        %s418 = sand.u32 %s244, 1
        %s419 = smul.addr %s418, 16
        %s420 = scalar_lea.vmem [#allocation11], %s419
        %p421 = scmp.lt.s32.totalorder %s32, 1
        %s422 = scalar_select %p421, %s32, 1
        %s423 = smul.addr %s422, 2
        %s424 = smul.addr %s423, 4
        %s425 = scalar_lea.vmem %s0, %s424
        %s426 = smul.u32 2, %s32
        %v428 = vld [vmem:[%s425] sm:$0xf]
        %v429 = vld [vmem:[%s425 + $0x4] sm:$0xf]
        %v430 = vld [vmem:[%s364] sm:$0xff]
        %v431 = vld [vmem:[%s364 + $0x8] sm:$0xff]
        %v432 = vpack.c.bf16 %v431, %v430
        %v433 = vld [vmem:[#allocation5] sm:$0xff]
        %v434 = vld [vmem:[#allocation5 + $0x8] sm:$0xf]
        %v435 = vld [vmem:[#allocation5 + $0xc] sm:$0xff]
        %v436 = vld [vmem:[#allocation5 + $0x14] sm:$0xf]
        %v437 = vld [vmem:[#allocation5 + $0x18] sm:$0xff]
        %v438 = vld [vmem:[#allocation5 + $0x20] sm:$0xf]
        %v439 = vld [vmem:[#allocation5 + $0x24] sm:$0xff]
        %v440 = vld [vmem:[#allocation5 + $0x2c] sm:$0xf]
        %v441 = vld [vmem:[#allocation5 + $0x30] sm:$0xff]
        %v442 = vld [vmem:[#allocation5 + $0x38] sm:$0xf]
        %v443 = vld [vmem:[#allocation5 + $0x3c] sm:$0xff]
        %v444 = vld [vmem:[#allocation5 + $0x44] sm:$0xf]
        %v445 = vld [vmem:[#allocation5 + $0x48] sm:$0xff]
        %v446 = vld [vmem:[#allocation5 + $0x50] sm:$0xf]
        %v447 = vld [vmem:[#allocation5 + $0x54] sm:$0xff]
        %v448 = vld [vmem:[#allocation5 + $0x5c] sm:$0xf]
        %v449 = vld [vmem:[#allocation5 + $0x60] sm:$0xff]
        %v450 = vld [vmem:[#allocation5 + $0x68] sm:$0xf]
        %v451 = vld [vmem:[#allocation5 + $0x6c] sm:$0xff]
        %v452 = vld [vmem:[#allocation5 + $0x74] sm:$0xf]
        %v453 = vld [vmem:[#allocation5 + $0x78] sm:$0xff]
        %v454 = vld [vmem:[#allocation5 + $0x80] sm:$0xf]
        %v455 = vld [vmem:[#allocation5 + $0x84] sm:$0xff]
        %v456 = vld [vmem:[#allocation5 + $0x8c] sm:$0xf]
        %v457 = vld [vmem:[#allocation5 + $0x90] sm:$0xff]
        %v458 = vld [vmem:[#allocation5 + $0x98] sm:$0xf]
        %v459 = vld [vmem:[#allocation5 + $0x9c] sm:$0xff]
        %v460 = vld [vmem:[#allocation5 + $0xa4] sm:$0xf]
        %v461 = vld [vmem:[#allocation5 + $0xa8] sm:$0xff]
        %v462 = vld [vmem:[#allocation5 + $0xb0] sm:$0xf]
        %v463 = vld [vmem:[#allocation5 + $0xb4] sm:$0xff]
        %v464 = vld [vmem:[#allocation5 + $0xbc] sm:$0xf]
        %v467 = vunpack.c.l.b16 %v428
        %v468 = vunpack.c.l.b16 %v429
        %v469 = vpack.c.b16 %v468, %v467
        %v503 = vunpack.c.l.b16 %v433
        %v504 = vunpack.c.h.b16 %v433
        %v505 = vunpack.c.l.b16 %v434
        %v506 = vunpack.c.l.b16 %v435
        %v507 = vunpack.c.h.b16 %v435
        %v508 = vunpack.c.l.b16 %v436
        %v509 = vunpack.c.l.b16 %v437
        %v510 = vunpack.c.h.b16 %v437
        %v511 = vunpack.c.l.b16 %v438
        %v512 = vunpack.c.l.b16 %v439
        %v513 = vunpack.c.h.b16 %v439
        %v514 = vunpack.c.l.b16 %v440
        %v515 = vunpack.c.l.b16 %v441
        %v516 = vunpack.c.h.b16 %v441
        %v517 = vunpack.c.l.b16 %v442
        %v518 = vunpack.c.l.b16 %v443
        %v519 = vunpack.c.h.b16 %v443
        %v520 = vunpack.c.l.b16 %v444
        %v521 = vunpack.c.l.b16 %v445
        %v522 = vunpack.c.h.b16 %v445
        %v523 = vunpack.c.l.b16 %v446
        %v524 = vunpack.c.l.b16 %v447
        %v525 = vunpack.c.h.b16 %v447
        %v526 = vunpack.c.l.b16 %v448
        %v527 = vunpack.c.l.b16 %v449
        %v528 = vunpack.c.h.b16 %v449
        %v529 = vunpack.c.l.b16 %v450
        %v530 = vunpack.c.l.b16 %v451
        %v531 = vunpack.c.h.b16 %v451
        %v532 = vunpack.c.l.b16 %v452
        %v533 = vunpack.c.l.b16 %v453
        %v534 = vunpack.c.h.b16 %v453
        %v535 = vunpack.c.l.b16 %v454
        %v536 = vunpack.c.l.b16 %v455
        %v537 = vunpack.c.h.b16 %v455
        %v538 = vunpack.c.l.b16 %v456
        %v539 = vunpack.c.l.b16 %v457
        %v540 = vunpack.c.h.b16 %v457
        %v541 = vunpack.c.l.b16 %v458
        %v542 = vunpack.c.l.b16 %v459
        %v543 = vunpack.c.h.b16 %v459
        %v544 = vunpack.c.l.b16 %v460
        %v545 = vunpack.c.l.b16 %v461
        %v546 = vunpack.c.h.b16 %v461
        %v547 = vunpack.c.l.b16 %v462
        %v548 = vunpack.c.l.b16 %v463
        %v549 = vunpack.c.h.b16 %v463
        %v550 = vunpack.c.l.b16 %v464
        %v551 = vpack.c.b16 %v506, %v503
        %v552 = vpack.c.b16 %v507, %v504
        %v553 = vpack.c.b16 %v508, %v505
        %v554 = vpack.c.b16 %v512, %v509
        %v555 = vpack.c.b16 %v513, %v510
        %v556 = vpack.c.b16 %v514, %v511
        %v557 = vpack.c.b16 %v518, %v515
        %v558 = vpack.c.b16 %v519, %v516
        %v559 = vpack.c.b16 %v520, %v517
        %v560 = vpack.c.b16 %v524, %v521
        %v561 = vpack.c.b16 %v525, %v522
        %v562 = vpack.c.b16 %v526, %v523
        %v563 = vpack.c.b16 %v530, %v527
        %v564 = vpack.c.b16 %v531, %v528
        %v565 = vpack.c.b16 %v532, %v529
        %v566 = vpack.c.b16 %v536, %v533
        %v567 = vpack.c.b16 %v537, %v534
        %v568 = vpack.c.b16 %v538, %v535
        %v569 = vpack.c.b16 %v542, %v539
        %v570 = vpack.c.b16 %v543, %v540
        %v571 = vpack.c.b16 %v544, %v541
        %v572 = vpack.c.b16 %v548, %v545
        %v573 = vpack.c.b16 %v549, %v546
        %v574 = vpack.c.b16 %v550, %v547
        %599 = vmatprep.subr.bf16.mxu0 %v552
        %600 = vmatpush1.bf16.msra.mxu0 %v551
        %601 = vmatprep.subr.bf16.mxu0 %v555
        %602 = vmatpush1.bf16.msra.mxu0 %v554
        %603 = vmatprep.subr.bf16.mxu0 %v558
        %604 = vmatpush1.bf16.msra.mxu0 %v557
        %605 = vmatprep.subr.bf16.mxu0 %v561
        %606 = vmatpush1.bf16.msra.mxu0 %v560
        %607 = vmatprep.subr.bf16.mxu0 %v564
        %608 = vmatpush1.bf16.msra.mxu0 %v563
        %609 = vmatprep.subr.bf16.mxu0 %v567
        %610 = vmatpush1.bf16.msra.mxu0 %v566
        %611 = vmatprep.subr.bf16.mxu0 %v570
        %612 = vmatpush1.bf16.msra.mxu0 %v569
        %613 = vmatprep.subr.bf16.mxu0 %v573
        %614 = vmatpush1.bf16.msra.mxu0 %v572
        %615 = vmatprep.subr.bf16.mxu0 0
        %616 = vmatpush1.bf16.msra.mxu0 0
        %617 = vmatprep.subr.bf16.mxu0 0
        %618 = vmatpush1.bf16.msra.mxu0 0
        %619 = vmatprep.subr.bf16.mxu0 0
        %620 = vmatpush1.bf16.msra.mxu0 0
        %621 = vmatprep.subr.bf16.mxu0 0
        %622 = vmatpush1.bf16.msra.mxu0 0
        %623 = vmatprep.subr.bf16.mxu0 0
        %624 = vmatpush1.bf16.msra.mxu0 0
        %625 = vmatprep.subr.bf16.mxu0 0
        %626 = vmatpush1.bf16.msra.mxu0 0
        %627 = vmatprep.subr.bf16.mxu0 0
        %628 = vmatpush1.bf16.msra.mxu0 0
        %629 = vmatprep.subr.bf16.mxu0 0
        %630 = vmatpush1.bf16.msra.mxu0 0
        %631 = vmatprep.mubr.bf16.mxu0 0
        %632 = vmatmul.mubr.bf16.gmra.mrb[0].mxu0 %v469
        %v633 = vpop.f32.mrb[0].mxu0
        %v634 = vadd.f32 0.0, %v633
        %v635 = vpop.f32.mrb[0].mxu0
        %v636 = vadd.f32 0.0, %v635
        %v637 = vpop.f32.mrb[0].mxu0
        %v638 = vadd.f32 0.0, %v637
        %v639 = vpop.f32.mrb[0].mxu0
        %v640 = vadd.f32 0.0, %v639
        %641 = vdwg.mxu0
        %642 = vmatprep.subr.bf16.mxu0 0
        %643 = vmatpush1.bf16.msra.mxu0 %v553
        %644 = vmatprep.subr.bf16.mxu0 0
        %645 = vmatpush1.bf16.msra.mxu0 %v556
        %646 = vmatprep.subr.bf16.mxu0 0
        %647 = vmatpush1.bf16.msra.mxu0 %v559
        %648 = vmatprep.subr.bf16.mxu0 0
        %649 = vmatpush1.bf16.msra.mxu0 %v562
        %650 = vmatprep.subr.bf16.mxu0 0
        %651 = vmatpush1.bf16.msra.mxu0 %v565
        %652 = vmatprep.subr.bf16.mxu0 0
        %653 = vmatpush1.bf16.msra.mxu0 %v568
        %654 = vmatprep.subr.bf16.mxu0 0
        %655 = vmatpush1.bf16.msra.mxu0 %v571
        %656 = vmatprep.subr.bf16.mxu0 0
        %657 = vmatpush1.bf16.msra.mxu0 %v574
        %658 = vmatprep.subr.bf16.mxu0 0
        %659 = vmatpush1.bf16.msra.mxu0 0
        %660 = vmatprep.subr.bf16.mxu0 0
        %661 = vmatpush1.bf16.msra.mxu0 0
        %662 = vmatprep.subr.bf16.mxu0 0
        %663 = vmatpush1.bf16.msra.mxu0 0
        %664 = vmatprep.subr.bf16.mxu0 0
        %665 = vmatpush1.bf16.msra.mxu0 0
        %666 = vmatprep.subr.bf16.mxu0 0
        %667 = vmatpush1.bf16.msra.mxu0 0
        %668 = vmatprep.subr.bf16.mxu0 0
        %669 = vmatpush1.bf16.msra.mxu0 0
        %670 = vmatprep.subr.bf16.mxu0 0
        %671 = vmatpush1.bf16.msra.mxu0 0
        %672 = vmatprep.subr.bf16.mxu0 0
        %673 = vmatpush1.bf16.msra.mxu0 0
        %674 = vmatprep.mubr.bf16.mxu0 0
        %675 = vmatmul.mubr.bf16.gmra.mrb[0].mxu0 %v469
        %v676 = vpop.f32.mrb[0].mxu0
        %v677 = vadd.f32 0.0, %v676
        %v678 = vpop.f32.mrb[0].mxu0
        %v679 = vpop.f32.mrb[0].mxu0
        %v680 = vadd.f32 0.0, %v679
        %v681 = vpop.f32.mrb[0].mxu0
        %682 = vdwg.mxu0
        %v683 = vld [vmem:[#allocation7] sm:$0xff]
        %v684 = vld [vmem:[#allocation7 + $0x8] sm:$0xf]
        %v685 = vld [vmem:[#allocation7 + $0xc] sm:$0xff]
        %v686 = vld [vmem:[#allocation7 + $0x14] sm:$0xf]
        %v687 = vld [vmem:[#allocation7 + $0x18] sm:$0xff]
        %v688 = vld [vmem:[#allocation7 + $0x20] sm:$0xf]
        %v689 = vld [vmem:[#allocation7 + $0x24] sm:$0xff]
        %v690 = vld [vmem:[#allocation7 + $0x2c] sm:$0xf]
        %v691 = vld [vmem:[#allocation7 + $0x30] sm:$0xff]
        %v692 = vld [vmem:[#allocation7 + $0x38] sm:$0xf]
        %v693 = vld [vmem:[#allocation7 + $0x3c] sm:$0xff]
        %v694 = vld [vmem:[#allocation7 + $0x44] sm:$0xf]
        %v695 = vld [vmem:[#allocation7 + $0x48] sm:$0xff]
        %v696 = vld [vmem:[#allocation7 + $0x50] sm:$0xf]
        %v697 = vld [vmem:[#allocation7 + $0x54] sm:$0xff]
        %v698 = vld [vmem:[#allocation7 + $0x5c] sm:$0xf]
        %v699 = vld [vmem:[#allocation7 + $0x60] sm:$0xff]
        %v700 = vld [vmem:[#allocation7 + $0x68] sm:$0xf]
        %v701 = vld [vmem:[#allocation7 + $0x6c] sm:$0xff]
        %v702 = vld [vmem:[#allocation7 + $0x74] sm:$0xf]
        %v703 = vld [vmem:[#allocation7 + $0x78] sm:$0xff]
        %v704 = vld [vmem:[#allocation7 + $0x80] sm:$0xf]
        %v705 = vld [vmem:[#allocation7 + $0x84] sm:$0xff]
        %v706 = vld [vmem:[#allocation7 + $0x8c] sm:$0xf]
        %v707 = vld [vmem:[#allocation7 + $0x90] sm:$0xff]
        %v708 = vld [vmem:[#allocation7 + $0x98] sm:$0xf]
        %v709 = vld [vmem:[#allocation7 + $0x9c] sm:$0xff]
        %v710 = vld [vmem:[#allocation7 + $0xa4] sm:$0xf]
        %v711 = vld [vmem:[#allocation7 + $0xa8] sm:$0xff]
        %v712 = vld [vmem:[#allocation7 + $0xb0] sm:$0xf]
        %v713 = vld [vmem:[#allocation7 + $0xb4] sm:$0xff]
        %v714 = vld [vmem:[#allocation7 + $0xbc] sm:$0xf]
        %v747 = vunpack.c.l.b16 %v683
        %v748 = vunpack.c.h.b16 %v683
        %v749 = vunpack.c.l.b16 %v684
        %v750 = vunpack.c.l.b16 %v685
        %v751 = vunpack.c.h.b16 %v685
        %v752 = vunpack.c.l.b16 %v686
        %v753 = vunpack.c.l.b16 %v687
        %v754 = vunpack.c.h.b16 %v687
        %v755 = vunpack.c.l.b16 %v688
        %v756 = vunpack.c.l.b16 %v689
        %v757 = vunpack.c.h.b16 %v689
        %v758 = vunpack.c.l.b16 %v690
        %v759 = vunpack.c.l.b16 %v691
        %v760 = vunpack.c.h.b16 %v691
        %v761 = vunpack.c.l.b16 %v692
        %v762 = vunpack.c.l.b16 %v693
        %v763 = vunpack.c.h.b16 %v693
        %v764 = vunpack.c.l.b16 %v694
        %v765 = vunpack.c.l.b16 %v695
        %v766 = vunpack.c.h.b16 %v695
        %v767 = vunpack.c.l.b16 %v696
        %v768 = vunpack.c.l.b16 %v697
        %v769 = vunpack.c.h.b16 %v697
        %v770 = vunpack.c.l.b16 %v698
        %v771 = vunpack.c.l.b16 %v699
        %v772 = vunpack.c.h.b16 %v699
        %v773 = vunpack.c.l.b16 %v700
        %v774 = vunpack.c.l.b16 %v701
        %v775 = vunpack.c.h.b16 %v701
        %v776 = vunpack.c.l.b16 %v702
        %v777 = vunpack.c.l.b16 %v703
        %v778 = vunpack.c.h.b16 %v703
        %v779 = vunpack.c.l.b16 %v704
        %v780 = vunpack.c.l.b16 %v705
        %v781 = vunpack.c.h.b16 %v705
        %v782 = vunpack.c.l.b16 %v706
        %v783 = vunpack.c.l.b16 %v707
        %v784 = vunpack.c.h.b16 %v707
        %v785 = vunpack.c.l.b16 %v708
        %v786 = vunpack.c.l.b16 %v709
        %v787 = vunpack.c.h.b16 %v709
        %v788 = vunpack.c.l.b16 %v710
        %v789 = vunpack.c.l.b16 %v711
        %v790 = vunpack.c.h.b16 %v711
        %v791 = vunpack.c.l.b16 %v712
        %v792 = vunpack.c.l.b16 %v713
        %v793 = vunpack.c.h.b16 %v713
        %v794 = vunpack.c.l.b16 %v714
        %v795 = vpack.c.b16 %v750, %v747
        %v796 = vpack.c.b16 %v751, %v748
        %v797 = vpack.c.b16 %v752, %v749
        %v798 = vpack.c.b16 %v756, %v753
        %v799 = vpack.c.b16 %v757, %v754
        %v800 = vpack.c.b16 %v758, %v755
        %v801 = vpack.c.b16 %v762, %v759
        %v802 = vpack.c.b16 %v763, %v760
        %v803 = vpack.c.b16 %v764, %v761
        %v804 = vpack.c.b16 %v768, %v765
        %v805 = vpack.c.b16 %v769, %v766
        %v806 = vpack.c.b16 %v770, %v767
        %v807 = vpack.c.b16 %v774, %v771
        %v808 = vpack.c.b16 %v775, %v772
        %v809 = vpack.c.b16 %v776, %v773
        %v810 = vpack.c.b16 %v780, %v777
        %v811 = vpack.c.b16 %v781, %v778
        %v812 = vpack.c.b16 %v782, %v779
        %v813 = vpack.c.b16 %v786, %v783
        %v814 = vpack.c.b16 %v787, %v784
        %v815 = vpack.c.b16 %v788, %v785
        %v816 = vpack.c.b16 %v792, %v789
        %v817 = vpack.c.b16 %v793, %v790
        %v818 = vpack.c.b16 %v794, %v791
        %843 = vmatprep.subr.bf16.mxu0 %v796
        %844 = vmatpush1.bf16.msra.mxu0 %v795
        %845 = vmatprep.subr.bf16.mxu0 %v799
        %846 = vmatpush1.bf16.msra.mxu0 %v798
        %847 = vmatprep.subr.bf16.mxu0 %v802
        %848 = vmatpush1.bf16.msra.mxu0 %v801
        %849 = vmatprep.subr.bf16.mxu0 %v805
        %850 = vmatpush1.bf16.msra.mxu0 %v804
        %851 = vmatprep.subr.bf16.mxu0 %v808
        %852 = vmatpush1.bf16.msra.mxu0 %v807
        %853 = vmatprep.subr.bf16.mxu0 %v811
        %854 = vmatpush1.bf16.msra.mxu0 %v810
        %855 = vmatprep.subr.bf16.mxu0 %v814
        %856 = vmatpush1.bf16.msra.mxu0 %v813
        %857 = vmatprep.subr.bf16.mxu0 %v817
        %858 = vmatpush1.bf16.msra.mxu0 %v816
        %859 = vmatprep.subr.bf16.mxu0 0
        %860 = vmatpush1.bf16.msra.mxu0 0
        %861 = vmatprep.subr.bf16.mxu0 0
        %862 = vmatpush1.bf16.msra.mxu0 0
        %863 = vmatprep.subr.bf16.mxu0 0
        %864 = vmatpush1.bf16.msra.mxu0 0
        %865 = vmatprep.subr.bf16.mxu0 0
        %866 = vmatpush1.bf16.msra.mxu0 0
        %867 = vmatprep.subr.bf16.mxu0 0
        %868 = vmatpush1.bf16.msra.mxu0 0
        %869 = vmatprep.subr.bf16.mxu0 0
        %870 = vmatpush1.bf16.msra.mxu0 0
        %871 = vmatprep.subr.bf16.mxu0 0
        %872 = vmatpush1.bf16.msra.mxu0 0
        %873 = vmatprep.subr.bf16.mxu0 0
        %874 = vmatpush1.bf16.msra.mxu0 0
        %875 = vmatprep.mubr.bf16.mxu0 0
        %876 = vmatmul.mubr.bf16.gmra.mrb[0].mxu0 %v432
        %v877 = vpop.f32.mrb[0].mxu0
        %v878 = vadd.f32 0.0, %v877
        %v879 = vpop.f32.mrb[0].mxu0
        %v880 = vadd.f32 0.0, %v879
        %v881 = vpop.f32.mrb[0].mxu0
        %v882 = vadd.f32 0.0, %v881
        %v883 = vpop.f32.mrb[0].mxu0
        %v884 = vadd.f32 0.0, %v883
        %885 = vdwg.mxu0
        %886 = vmatprep.subr.bf16.mxu0 0
        %887 = vmatpush1.bf16.msra.mxu0 %v797
        %888 = vmatprep.subr.bf16.mxu0 0
        %889 = vmatpush1.bf16.msra.mxu0 %v800
        %890 = vmatprep.subr.bf16.mxu0 0
        %891 = vmatpush1.bf16.msra.mxu0 %v803
        %892 = vmatprep.subr.bf16.mxu0 0
        %893 = vmatpush1.bf16.msra.mxu0 %v806
        %894 = vmatprep.subr.bf16.mxu0 0
        %895 = vmatpush1.bf16.msra.mxu0 %v809
        %896 = vmatprep.subr.bf16.mxu0 0
        %897 = vmatpush1.bf16.msra.mxu0 %v812
        %898 = vmatprep.subr.bf16.mxu0 0
        %899 = vmatpush1.bf16.msra.mxu0 %v815
        %900 = vmatprep.subr.bf16.mxu0 0
        %901 = vmatpush1.bf16.msra.mxu0 %v818
        %902 = vmatprep.subr.bf16.mxu0 0
        %903 = vmatpush1.bf16.msra.mxu0 0
        %904 = vmatprep.subr.bf16.mxu0 0
        %905 = vmatpush1.bf16.msra.mxu0 0
        %906 = vmatprep.subr.bf16.mxu0 0
        %907 = vmatpush1.bf16.msra.mxu0 0
        %908 = vmatprep.subr.bf16.mxu0 0
        %909 = vmatpush1.bf16.msra.mxu0 0
        %910 = vmatprep.subr.bf16.mxu0 0
        %911 = vmatpush1.bf16.msra.mxu0 0
        %912 = vmatprep.subr.bf16.mxu0 0
        %913 = vmatpush1.bf16.msra.mxu0 0
        %914 = vmatprep.subr.bf16.mxu0 0
        %915 = vmatpush1.bf16.msra.mxu0 0
        %916 = vmatprep.subr.bf16.mxu0 0
        %917 = vmatpush1.bf16.msra.mxu0 0
        %918 = vmatprep.mubr.bf16.mxu0 0
        %919 = vmatmul.mubr.bf16.gmra.mrb[0].mxu0 %v432
        %v920 = vpop.f32.mrb[0].mxu0
        %v921 = vadd.f32 0.0, %v920
        %v922 = vpop.f32.mrb[0].mxu0
        %v923 = vpop.f32.mrb[0].mxu0
        %v924 = vadd.f32 0.0, %v923
        %v925 = vpop.f32.mrb[0].mxu0
        %926 = vdwg.mxu0
        %v927 = vpack.c.bf16 %v638, %v634
        %v928 = vpack.c.bf16 %v640, %v636
        %v929 = vpack.c.bf16 %v680, %v677
        %v930 = vpack.c.bf16 %v882, %v878
        %v931 = vpack.c.bf16 %v884, %v880
        %v932 = vpack.c.bf16 %v924, %v921
        %933 = vmatprep.subr.bf16.mxu0 0
        %934 = vmatpush1.bf16.xpose.msra.mxu0 %v931
        %935 = vmatprep.subr.bf16.mxu0 0
        %936 = vmatpush1.bf16.xpose.msra.mxu0 %v928
        %937 = vmatprep.subr.bf16.mxu0 0
        %938 = vmatpush1.bf16.xpose.msra.mxu0 0
        %939 = vmatprep.subr.bf16.mxu0 0
        %940 = vmatpush1.bf16.xpose.msra.mxu0 0
        %941 = vmatprep.subr.bf16.mxu0 0
        %942 = vmatpush1.bf16.xpose.msra.mxu0 0
        %943 = vmatprep.subr.bf16.mxu0 0
        %944 = vmatpush1.bf16.xpose.msra.mxu0 0
        %945 = vmatprep.subr.bf16.mxu0 0
        %946 = vmatpush1.bf16.xpose.msra.mxu0 0
        %947 = vmatprep.subr.bf16.mxu0 0
        %948 = vmatpush1.bf16.xpose.msra.mxu0 0
        %949 = vmatprep.subr.bf16.mxu0 0
        %950 = vmatpush1.bf16.xpose.msra.mxu0 0
        %951 = vmatprep.subr.bf16.mxu0 0
        %952 = vmatpush1.bf16.xpose.msra.mxu0 0
        %953 = vmatprep.subr.bf16.mxu0 0
        %954 = vmatpush1.bf16.xpose.msra.mxu0 0
        %955 = vmatprep.subr.bf16.mxu0 0
        %956 = vmatpush1.bf16.xpose.msra.mxu0 0
        %957 = vmatprep.subr.bf16.mxu0 0
        %958 = vmatpush1.bf16.xpose.msra.mxu0 0
        %959 = vmatprep.subr.bf16.mxu0 0
        %960 = vmatpush1.bf16.xpose.msra.mxu0 0
        %961 = vmatprep.subr.bf16.mxu0 0
        %962 = vmatpush1.bf16.xpose.msra.mxu0 0
        %963 = vmatprep.subr.bf16.mxu0 0
        %964 = vmatpush1.bf16.xpose.msra.mxu0 0
        %965 = vmatprep.mubr.bf16.mxu0 0
        %966 = vmatmul.mubr.bf16.gmra.mrb[0].mxu0 %v927
        %v967 = vpop.f32.mrb[0].mxu0
        %v968 = vadd.f32 0.0, %v967
        %v969 = vpop.f32.mrb[0].mxu0
        %v970 = vpop.f32.mrb[0].mxu0
        %v971 = vadd.f32 0.0, %v970
        %v972 = vpop.f32.mrb[0].mxu0
        %973 = vdwg.mxu0
        %vm974 = vcmask 261120
        %v975 = vsel %vm974, %v968, -inf
        %976 = vmax.xlane.f32.xlu0 %v975
        %v977 = vpop.xlane.xlu0 %976
        %v978 = vsel %vm974, %v971, -inf
        %979 = vmax.xlane.f32.xlu0 %v978
        %v980 = vpop.xlane.xlu0 %979
        %v981 = vsub.f32 %v968, %v977
        %v982 = vsub.f32 %v971, %v980
        %v983 = vmul.f32 %v981, 1.442695
        %v984 = vpow.pop %v983
        %v985 = vmul.f32 %v982, 1.442695
        %v986 = vpow.pop %v985
        %v987 = vsel %vm974, %v984, 0.0
        %988 = vadd.xlane.f32.xlu0 %v987
        %v989 = vpop.xlane.xlu0 %988
        %v990 = vsel %vm974, %v986, 0.0
        %991 = vadd.xlane.f32.xlu0 %v990
        %v992 = vpop.xlane.xlu0 %991
        %v993 = vrcp.pop %v989
        %v994 = vrcp.pop %v992
        %v995 = vpack.c.bf16 %v986, %v984
        %v997 = vsel %vm974, %v995, 0
        %999 = vmatprep.subr.bf16.mxu0 0
        %1000 = vmatpush1.bf16.msra.mxu0 %v932
        %1001 = vmatprep.subr.bf16.mxu0 0
        %1002 = vmatpush1.bf16.msra.mxu0 %v929
        %1003 = vmatprep.subr.bf16.mxu0 0
        %1004 = vmatpush1.bf16.msra.mxu0 0
        %1005 = vmatprep.subr.bf16.mxu0 0
        %1006 = vmatpush1.bf16.msra.mxu0 0
        %1007 = vmatprep.subr.bf16.mxu0 0
        %1008 = vmatpush1.bf16.msra.mxu0 0
        %1009 = vmatprep.subr.bf16.mxu0 0
        %1010 = vmatpush1.bf16.msra.mxu0 0
        %1011 = vmatprep.subr.bf16.mxu0 0
        %1012 = vmatpush1.bf16.msra.mxu0 0
        %1013 = vmatprep.subr.bf16.mxu0 0
        %1014 = vmatpush1.bf16.msra.mxu0 0
        %1015 = vmatprep.subr.bf16.mxu0 0
        %1016 = vmatpush1.bf16.msra.mxu0 0
        %1017 = vmatprep.subr.bf16.mxu0 0
        %1018 = vmatpush1.bf16.msra.mxu0 0
        %1019 = vmatprep.subr.bf16.mxu0 0
        %1020 = vmatpush1.bf16.msra.mxu0 0
        %1021 = vmatprep.subr.bf16.mxu0 0
        %1022 = vmatpush1.bf16.msra.mxu0 0
        %1023 = vmatprep.subr.bf16.mxu0 0
        %1024 = vmatpush1.bf16.msra.mxu0 0
        %1025 = vmatprep.subr.bf16.mxu0 0
        %1026 = vmatpush1.bf16.msra.mxu0 0
        %1027 = vmatprep.subr.bf16.mxu0 0
        %1028 = vmatpush1.bf16.msra.mxu0 0
        %1029 = vmatprep.subr.bf16.mxu0 0
        %1030 = vmatpush1.bf16.msra.mxu0 0
        %1031 = vmatprep.mubr.bf16.mxu0 0
        %1032 = vmatmul.mubr.bf16.gmra.mrb[0].mxu0 %v997
        %v1033 = vpop.f32.mrb[0].mxu0
        %v1034 = vadd.f32 0.0, %v1033
        %v1035 = vpop.f32.mrb[0].mxu0
        %v1036 = vpop.f32.mrb[0].mxu0
        %v1037 = vadd.f32 0.0, %v1036
        %v1038 = vpop.f32.mrb[0].mxu0
        %1039 = vdwg.mxu0
        %v1040 = vmul.f32 %v1034, %v993
        %v1041 = vmul.f32 %v1037, %v994
        %v1042 = vpack.c.bf16 %v1041, %v1040
        %v1043 = vld [vmem:[%s3] sm:$0xf]
        %v1044 = vld [vmem:[%s3 + $0x4] sm:$0xf]
        %v1045 = vld [vmem:[%s3 + $0x8] sm:$0xf]
        %v1046 = vld [vmem:[%s3 + $0xc] sm:$0xf]
        %v1047 = vld [vmem:[%s3 + $0x10] sm:$0xf]
        %v1048 = vld [vmem:[%s3 + $0x14] sm:$0xf]
        %v1049 = vld [vmem:[%s3 + $0x18] sm:$0xf]
        %v1050 = vld [vmem:[%s3 + $0x1c] sm:$0xf]
        %v1051 = vld [vmem:[%s3 + $0x20] sm:$0xf]
        %v1052 = vld [vmem:[%s3 + $0x24] sm:$0xf]
        %v1053 = vld [vmem:[%s3 + $0x28] sm:$0xf]
        %v1054 = vld [vmem:[%s3 + $0x2c] sm:$0xf]
        %v1055 = vld [vmem:[%s3 + $0x30] sm:$0xf]
        %v1056 = vld [vmem:[%s3 + $0x34] sm:$0xf]
        %v1057 = vld [vmem:[%s3 + $0x38] sm:$0xf]
        %v1058 = vld [vmem:[%s3 + $0x3c] sm:$0xf]
        %v1075 = vunpack.c.l.b16 %v1043
        %v1076 = vunpack.c.l.b16 %v1044
        %v1077 = vunpack.c.l.b16 %v1045
        %v1078 = vunpack.c.l.b16 %v1046
        %v1079 = vunpack.c.l.b16 %v1047
        %v1080 = vunpack.c.l.b16 %v1048
        %v1081 = vunpack.c.l.b16 %v1049
        %v1082 = vunpack.c.l.b16 %v1050
        %v1083 = vunpack.c.l.b16 %v1051
        %v1084 = vunpack.c.l.b16 %v1052
        %v1085 = vunpack.c.l.b16 %v1053
        %v1086 = vunpack.c.l.b16 %v1054
        %v1087 = vunpack.c.l.b16 %v1055
        %v1088 = vunpack.c.l.b16 %v1056
        %v1089 = vunpack.c.l.b16 %v1057
        %v1090 = vunpack.c.l.b16 %v1058
        %v1091 = vpack.c.b16 %v1076, %v1075
        %v1092 = vpack.c.b16 %v1078, %v1077
        %v1093 = vpack.c.b16 %v1080, %v1079
        %v1094 = vpack.c.b16 %v1082, %v1081
        %v1095 = vpack.c.b16 %v1084, %v1083
        %v1096 = vpack.c.b16 %v1086, %v1085
        %v1097 = vpack.c.b16 %v1088, %v1087
        %v1098 = vpack.c.b16 %v1090, %v1089
        %1107 = vmatprep.subr.bf16.mxu0 0
        %1108 = vmatpush1.bf16.msra.mxu0 %v1091
        %1109 = vmatprep.subr.bf16.mxu0 0
        %1110 = vmatpush1.bf16.msra.mxu0 %v1092
        %1111 = vmatprep.subr.bf16.mxu0 0
        %1112 = vmatpush1.bf16.msra.mxu0 %v1093
        %1113 = vmatprep.subr.bf16.mxu0 0
        %1114 = vmatpush1.bf16.msra.mxu0 %v1094
        %1115 = vmatprep.subr.bf16.mxu0 0
        %1116 = vmatpush1.bf16.msra.mxu0 %v1095
        %1117 = vmatprep.subr.bf16.mxu0 0
        %1118 = vmatpush1.bf16.msra.mxu0 %v1096
        %1119 = vmatprep.subr.bf16.mxu0 0
        %1120 = vmatpush1.bf16.msra.mxu0 %v1097
        %1121 = vmatprep.subr.bf16.mxu0 0
        %1122 = vmatpush1.bf16.msra.mxu0 %v1098
        %1123 = vmatprep.subr.bf16.mxu0 0
        %1124 = vmatpush1.bf16.msra.mxu0 0
        %1125 = vmatprep.subr.bf16.mxu0 0
        %1126 = vmatpush1.bf16.msra.mxu0 0
        %1127 = vmatprep.subr.bf16.mxu0 0
        %1128 = vmatpush1.bf16.msra.mxu0 0
        %1129 = vmatprep.subr.bf16.mxu0 0
        %1130 = vmatpush1.bf16.msra.mxu0 0
        %1131 = vmatprep.subr.bf16.mxu0 0
        %1132 = vmatpush1.bf16.msra.mxu0 0
        %1133 = vmatprep.subr.bf16.mxu0 0
        %1134 = vmatpush1.bf16.msra.mxu0 0
        %1135 = vmatprep.subr.bf16.mxu0 0
        %1136 = vmatpush1.bf16.msra.mxu0 0
        %1137 = vmatprep.subr.bf16.mxu0 0
        %1138 = vmatpush1.bf16.msra.mxu0 0
        %1139 = vmatprep.mubr.bf16.mxu0 0
        %1140 = vmatmul.mubr.bf16.gmra.mrb[0].mxu0 %v1042
        %v1141 = vpop.f32.mrb[0].mxu0
        %v1142 = vadd.f32 0.0, %v1141
        %v1143 = vpop.f32.mrb[0].mxu0
        %v1144 = vpop.f32.mrb[0].mxu0
        %v1145 = vadd.f32 0.0, %v1144
        %v1146 = vpop.f32.mrb[0].mxu0
        %1147 = vdwg.mxu0
        %1148 = vmatprep.subr.bf16.mxu0 0
        %1149 = vmatpush1.bf16.xpose.msra.mxu0 %v928
        %1150 = vmatprep.subr.bf16.mxu0 0
        %1151 = vmatpush1.bf16.xpose.msra.mxu0 0
        %1152 = vmatprep.subr.bf16.mxu0 0
        %1153 = vmatpush1.bf16.xpose.msra.mxu0 0
        %1154 = vmatprep.subr.bf16.mxu0 0
        %1155 = vmatpush1.bf16.xpose.msra.mxu0 0
        %1156 = vmatprep.subr.bf16.mxu0 0
        %1157 = vmatpush1.bf16.xpose.msra.mxu0 0
        %1158 = vmatprep.subr.bf16.mxu0 0
        %1159 = vmatpush1.bf16.xpose.msra.mxu0 0
        %1160 = vmatprep.subr.bf16.mxu0 0
        %1161 = vmatpush1.bf16.xpose.msra.mxu0 0
        %1162 = vmatprep.subr.bf16.mxu0 0
        %1163 = vmatpush1.bf16.xpose.msra.mxu0 0
        %1164 = vmatprep.subr.bf16.mxu0 0
        %1165 = vmatpush1.bf16.xpose.msra.mxu0 0
        %1166 = vmatprep.subr.bf16.mxu0 0
        %1167 = vmatpush1.bf16.xpose.msra.mxu0 0
        %1168 = vmatprep.subr.bf16.mxu0 0
        %1169 = vmatpush1.bf16.xpose.msra.mxu0 0
        %1170 = vmatprep.subr.bf16.mxu0 0
        %1171 = vmatpush1.bf16.xpose.msra.mxu0 0
        %1172 = vmatprep.subr.bf16.mxu0 0
        %1173 = vmatpush1.bf16.xpose.msra.mxu0 0
        %1174 = vmatprep.subr.bf16.mxu0 0
        %1175 = vmatpush1.bf16.xpose.msra.mxu0 0
        %1176 = vmatprep.subr.bf16.mxu0 0
        %1177 = vmatpush1.bf16.xpose.msra.mxu0 0
        %1178 = vmatprep.subr.bf16.mxu0 0
        %1179 = vmatpush1.bf16.xpose.msra.mxu0 0
        %1180 = vmatprep.mubr.bf16.mxu0 0
        %1181 = vmatmul.mubr.bf16.gmra.mrb[0].mxu0 %v930
        %v1182 = vpop.f32.mrb[0].mxu0
        %v1183 = vadd.f32 0.0, %v1182
        %v1184 = vpop.f32.mrb[0].mxu0
        %v1185 = vpop.f32.mrb[0].mxu0
        %v1186 = vadd.f32 0.0, %v1185
        %v1187 = vpop.f32.mrb[0].mxu0
        %1188 = vdwg.mxu0
        %vm1189 = vcmask 130048
        %v1190 = vsel %vm1189, %v1183, -inf
        %1191 = vmax.xlane.f32.xlu0 %v1190
        %v1192 = vpop.xlane.xlu0 %1191
        %v1193 = vsel %vm1189, %v1186, -inf
        %1194 = vmax.xlane.f32.xlu0 %v1193
        %v1195 = vpop.xlane.xlu0 %1194
        %v1196 = vsub.f32 %v1183, %v1192
        %v1197 = vsub.f32 %v1186, %v1195
        %v1198 = vmul.f32 %v1196, 1.442695
        %v1199 = vpow.pop %v1198
        %v1200 = vmul.f32 %v1197, 1.442695
        %v1201 = vpow.pop %v1200
        %v1202 = vsel %vm1189, %v1199, 0.0
        %1203 = vadd.xlane.f32.xlu0 %v1202
        %v1204 = vpop.xlane.xlu0 %1203
        %v1205 = vsel %vm1189, %v1201, 0.0
        %1206 = vadd.xlane.f32.xlu0 %v1205
        %v1207 = vpop.xlane.xlu0 %1206
        %v1208 = vrcp.pop %v1204
        %v1209 = vrcp.pop %v1207
        %v1210 = vpack.c.bf16 %v1201, %v1199
        %v1212 = vsel %vm1189, %v1210, 0
        %1214 = vmatprep.subr.bf16.mxu0 0
        %1215 = vmatpush1.bf16.msra.mxu0 %v929
        %1216 = vmatprep.subr.bf16.mxu0 0
        %1217 = vmatpush1.bf16.msra.mxu0 0
        %1218 = vmatprep.subr.bf16.mxu0 0
        %1219 = vmatpush1.bf16.msra.mxu0 0
        %1220 = vmatprep.subr.bf16.mxu0 0
        %1221 = vmatpush1.bf16.msra.mxu0 0
        %1222 = vmatprep.subr.bf16.mxu0 0
        %1223 = vmatpush1.bf16.msra.mxu0 0
        %1224 = vmatprep.subr.bf16.mxu0 0
        %1225 = vmatpush1.bf16.msra.mxu0 0
        %1226 = vmatprep.subr.bf16.mxu0 0
        %1227 = vmatpush1.bf16.msra.mxu0 0
        %1228 = vmatprep.subr.bf16.mxu0 0
        %1229 = vmatpush1.bf16.msra.mxu0 0
        %1230 = vmatprep.subr.bf16.mxu0 0
        %1231 = vmatpush1.bf16.msra.mxu0 0
        %1232 = vmatprep.subr.bf16.mxu0 0
        %1233 = vmatpush1.bf16.msra.mxu0 0
        %1234 = vmatprep.subr.bf16.mxu0 0
        %1235 = vmatpush1.bf16.msra.mxu0 0
        %1236 = vmatprep.subr.bf16.mxu0 0
        %1237 = vmatpush1.bf16.msra.mxu0 0
        %1238 = vmatprep.subr.bf16.mxu0 0
        %1239 = vmatpush1.bf16.msra.mxu0 0
        %1240 = vmatprep.subr.bf16.mxu0 0
        %1241 = vmatpush1.bf16.msra.mxu0 0
        %1242 = vmatprep.subr.bf16.mxu0 0
        %1243 = vmatpush1.bf16.msra.mxu0 0
        %1244 = vmatprep.subr.bf16.mxu0 0
        %1245 = vmatpush1.bf16.msra.mxu0 0
        %1246 = vmatprep.mubr.bf16.mxu0 0
        %1247 = vmatmul.mubr.bf16.gmra.mrb[0].mxu0 %v1212
        %v1248 = vpop.f32.mrb[0].mxu0
        %v1249 = vadd.f32 0.0, %v1248
        %v1250 = vpop.f32.mrb[0].mxu0
        %v1251 = vpop.f32.mrb[0].mxu0
        %v1252 = vadd.f32 0.0, %v1251
        %v1253 = vpop.f32.mrb[0].mxu0
        %1254 = vdwg.mxu0
        %v1255 = vmul.f32 %v1249, %v1208
        %v1256 = vmul.f32 %v1252, %v1209
        %v1257 = vpack.c.bf16 %v1256, %v1255
        %v1258 = vld [vmem:[#allocation8] sm:$0xf]
        %v1259 = vld [vmem:[#allocation8 + $0x4] sm:$0xf]
        %v1260 = vld [vmem:[#allocation8 + $0x8] sm:$0xf]
        %v1261 = vld [vmem:[#allocation8 + $0xc] sm:$0xf]
        %v1262 = vld [vmem:[#allocation8 + $0x10] sm:$0xf]
        %v1263 = vld [vmem:[#allocation8 + $0x14] sm:$0xf]
        %v1264 = vld [vmem:[#allocation8 + $0x18] sm:$0xf]
        %v1265 = vld [vmem:[#allocation8 + $0x1c] sm:$0xf]
        %v1266 = vld [vmem:[#allocation8 + $0x20] sm:$0xf]
        %v1267 = vld [vmem:[#allocation8 + $0x24] sm:$0xf]
        %v1268 = vld [vmem:[#allocation8 + $0x28] sm:$0xf]
        %v1269 = vld [vmem:[#allocation8 + $0x2c] sm:$0xf]
        %v1270 = vld [vmem:[#allocation8 + $0x30] sm:$0xf]
        %v1271 = vld [vmem:[#allocation8 + $0x34] sm:$0xf]
        %v1272 = vld [vmem:[#allocation8 + $0x38] sm:$0xf]
        %v1273 = vld [vmem:[#allocation8 + $0x3c] sm:$0xf]
        %v1290 = vunpack.c.l.b16 %v1258
        %v1291 = vunpack.c.l.b16 %v1259
        %v1292 = vunpack.c.l.b16 %v1260
        %v1293 = vunpack.c.l.b16 %v1261
        %v1294 = vunpack.c.l.b16 %v1262
        %v1295 = vunpack.c.l.b16 %v1263
        %v1296 = vunpack.c.l.b16 %v1264
        %v1297 = vunpack.c.l.b16 %v1265
        %v1298 = vunpack.c.l.b16 %v1266
        %v1299 = vunpack.c.l.b16 %v1267
        %v1300 = vunpack.c.l.b16 %v1268
        %v1301 = vunpack.c.l.b16 %v1269
        %v1302 = vunpack.c.l.b16 %v1270
        %v1303 = vunpack.c.l.b16 %v1271
        %v1304 = vunpack.c.l.b16 %v1272
        %v1305 = vunpack.c.l.b16 %v1273
        %v1306 = vpack.c.b16 %v1291, %v1290
        %v1307 = vpack.c.b16 %v1293, %v1292
        %v1308 = vpack.c.b16 %v1295, %v1294
        %v1309 = vpack.c.b16 %v1297, %v1296
        %v1310 = vpack.c.b16 %v1299, %v1298
        %v1311 = vpack.c.b16 %v1301, %v1300
        %v1312 = vpack.c.b16 %v1303, %v1302
        %v1313 = vpack.c.b16 %v1305, %v1304
        %1322 = vmatprep.subr.bf16.mxu0 0
        %1323 = vmatpush1.bf16.msra.mxu0 %v1306
        %1324 = vmatprep.subr.bf16.mxu0 0
        %1325 = vmatpush1.bf16.msra.mxu0 %v1307
        %1326 = vmatprep.subr.bf16.mxu0 0
        %1327 = vmatpush1.bf16.msra.mxu0 %v1308
        %1328 = vmatprep.subr.bf16.mxu0 0
        %1329 = vmatpush1.bf16.msra.mxu0 %v1309
        %1330 = vmatprep.subr.bf16.mxu0 0
        %1331 = vmatpush1.bf16.msra.mxu0 %v1310
        %1332 = vmatprep.subr.bf16.mxu0 0
        %1333 = vmatpush1.bf16.msra.mxu0 %v1311
        %1334 = vmatprep.subr.bf16.mxu0 0
        %1335 = vmatpush1.bf16.msra.mxu0 %v1312
        %1336 = vmatprep.subr.bf16.mxu0 0
        %1337 = vmatpush1.bf16.msra.mxu0 %v1313
        %1338 = vmatprep.subr.bf16.mxu0 0
        %1339 = vmatpush1.bf16.msra.mxu0 0
        %1340 = vmatprep.subr.bf16.mxu0 0
        %1341 = vmatpush1.bf16.msra.mxu0 0
        %1342 = vmatprep.subr.bf16.mxu0 0
        %1343 = vmatpush1.bf16.msra.mxu0 0
        %1344 = vmatprep.subr.bf16.mxu0 0
        %1345 = vmatpush1.bf16.msra.mxu0 0
        %1346 = vmatprep.subr.bf16.mxu0 0
        %1347 = vmatpush1.bf16.msra.mxu0 0
        %1348 = vmatprep.subr.bf16.mxu0 0
        %1349 = vmatpush1.bf16.msra.mxu0 0
        %1350 = vmatprep.subr.bf16.mxu0 0
        %1351 = vmatpush1.bf16.msra.mxu0 0
        %1352 = vmatprep.subr.bf16.mxu0 0
        %1353 = vmatpush1.bf16.msra.mxu0 0
        %1354 = vmatprep.mubr.bf16.mxu0 0
        %1355 = vmatmul.mubr.bf16.gmra.mrb[0].mxu0 %v1257
        %v1356 = vpop.f32.mrb[0].mxu0
        %v1357 = vadd.f32 0.0, %v1356
        %v1358 = vpop.f32.mrb[0].mxu0
        %v1359 = vpop.f32.mrb[0].mxu0
        %v1360 = vadd.f32 0.0, %v1359
        %v1361 = vpop.f32.mrb[0].mxu0
        %1362 = vdwg.mxu0
        %1363 = vst [vmem:[%s420] sm:$0xff] %v1357
        %1364 = vst [vmem:[%s420 + $0x8] sm:$0xff] %v1360
        %1365 = vadd.xlane.f32.xlu0 %v1142
        %v1366 = vpop.xlane.xlu0 %1365
        %1367 = vadd.xlane.f32.xlu0 %v1145
        %v1368 = vpop.xlane.xlu0 %1367
        %v1369 = vrcp.pop 128.0
        %v1370 = vmul.f32 %v1366, %v1369
        %v1371 = vmul.f32 %v1368, %v1369
        %v1372 = vsub.f32 %v1142, %v1370
        %v1373 = vsub.f32 %v1145, %v1371
        %v1374 = vmul.f32 %v1372, %v1372
        %v1375 = vmul.f32 %v1373, %v1373
        %1376 = vadd.xlane.f32.xlu0 %v1374
        %v1377 = vpop.xlane.xlu0 %1376
        %1378 = vadd.xlane.f32.xlu0 %v1375
        %v1379 = vpop.xlane.xlu0 %1378
        %v1380 = vmul.f32 %v1377, %v1369
        %v1381 = vmul.f32 %v1379, %v1369
        %v1382 = vadd.f32 %v1380, 1e-05
        %v1383 = vadd.f32 %v1381, 1e-05
        %v1384 = vrsqrt.pop %v1382
        %v1385 = vrsqrt.pop %v1383
        %v1386 = vmul.f32 %v1372, %v1384
        %v1387 = vmul.f32 %v1373, %v1385
        %v1388 = vld [vmem:[%s6] sm:$0x1]
        %v1390 = vlaneseq
        %v1391 = vshrl.u32 %v1390, 7
        %v1392 = vsub.s32 0, %v1391
        %v1393 = vrot.slane %v1388, %v1392
        %v1395 = vmul.f32 %v1386, %v1393
        %v1396 = vmul.f32 %v1387, %v1393
        %v1397 = vld [vmem:[%s7] sm:$0x1]
        %v1399 = vlaneseq
        %v1400 = vshrl.u32 %v1399, 7
        %v1401 = vsub.s32 0, %v1400
        %v1402 = vrot.slane %v1397, %v1401
        %v1404 = vadd.f32 %v1395, %v1402
        %v1405 = vadd.f32 %v1396, %v1402
        %v1406 = vpack.c.bf16 %v1405, %v1404
        %v1408 = vunpack.c.l.b16 %v1406
        %v1409 = vunpack.c.h.b16 %v1406
        %v1410 = vpack.c.b16 %v1408, %v1408
        %v1411 = vpack.c.b16 %v1409, %v1409
        %1414 = vst [vmem:[%s413] sm:$0xf] %v1410
        %1415 = vst [vmem:[%s413 + $0x4] sm:$0xf] %v1411
        %s1416 = sand.u32 %s218, 1
        %s1417 = scalar_lea.sflag [#allocation4], %s1416
        %s1418 = sand.u32 %s218, 1
        %s1419 = smul.addr %s1418, 8
        %s1420 = scalar_lea.vmem [#allocation10], %s1419
        %s1421 = sand.u32 %s244, 1
        %s1422 = scalar_lea.sflag [#allocation12], %s1421
        %s1423 = sand.u32 %s244, 1
        %s1424 = smul.addr %s1423, 16
        %s1425 = scalar_lea.vmem [#allocation11], %s1424
        // Predicated region
        $region69: #{tpu_custom_call.1} parent=51 // pred_check
          %p1426 = pneg %p228
        $region70: #{tpu_custom_call.1} parent=51 // pred_check_branch
          %1428 = sbr.rel (%p1426) target = $region72
        $region71: #{tpu_custom_call.1} parent=51 // pred_region
          %s1429 = smul.u32 2, %s32
          %s1431 = ssub.s32 128, 128
          %1432 = vsyncadd %s1417, %s1431
          %s1433 = smul.addr %s1429, 64
          %s1434 = scalar_lea.hbm %s8, %s1433
          %s1435 = sshll.u32 %s1420, 4
          %s1436 = int_to_ptr.vmem [resolvable:$true] %s1435
          %1441 = dma.vmem_to_hbm [thread:$0]  %s1436, 128, %s1434, %s1417, 64, 64, 4
        $region72: #{tpu_custom_call.1} parent=51 // pred_fallthru
          _
        // Predicated region
        $region73: #{tpu_custom_call.1} parent=51 // pred_check
          %p1442 = pneg %p254
        $region74: #{tpu_custom_call.1} parent=51 // pred_check_branch
          %1444 = sbr.rel (%p1442) target = $region76
        $region75: #{tpu_custom_call.1} parent=51 // pred_region
          %s1446 = ssub.s32 256, 256
          %1447 = vsyncadd %s1422, %s1446
          %s1448 = smul.addr %s32, 2
          %s1449 = smul.addr %s1448, 128
          %s1450 = scalar_lea.hbm %s9, %s1449
          %s1451 = sshll.u32 %s1425, 4
          %s1452 = int_to_ptr.vmem [resolvable:$true] %s1451
          %1457 = dma.vmem_to_hbm [thread:$0]  %s1452, 256, %s1450, %s1422, 128, 128, 8
        $region76: #{tpu_custom_call.1} parent=51 // pred_fallthru
          _
      $region52: #{tpu_custom_call.1} parent=5 // pred_fallthru
        _
      %p1458 = scmp.le.s32.totalorder 2, %s27
      // Predicated region
      $region77: #{tpu_custom_call.1} parent=5 // pred_check
        %p1459 = pneg %p1458
      $region78: #{tpu_custom_call.1} parent=5 // pred_check_branch
        %1461 = sbr.rel (%p1459) target = $region80
      $region79: #{tpu_custom_call.1} parent=5 // pred_region
        %s1462 = ssub.s32 %s27, 2
        // Predicated region
        $region81: #{tpu_custom_call.1} parent=79 // pred_check
          %p1463 = pneg %p234
        $region82: #{tpu_custom_call.1} parent=79 // pred_check_branch
          %1465 = sbr.rel (%p1463) target = $region84
        $region83: #{tpu_custom_call.1} parent=79 // pred_region
          %s1466 = sand.u32 %s219, 1
          %s1467 = scalar_lea.sflag [#allocation4], %s1466
          %s1468 = sand.u32 %s219, 1
          %s1469 = smul.addr %s1468, 8
          %s1470 = scalar_lea.vmem [#allocation10], %s1469
          %1471 = dma.done %s1467, 128
        $region84: #{tpu_custom_call.1} parent=79 // pred_fallthru
          _
        // Predicated region
        $region85: #{tpu_custom_call.1} parent=79 // pred_check
          %p1472 = pneg %p260
        $region86: #{tpu_custom_call.1} parent=79 // pred_check_branch
          %1474 = sbr.rel (%p1472) target = $region88
        $region87: #{tpu_custom_call.1} parent=79 // pred_region
          %s1475 = sand.u32 %s245, 1
          %s1476 = scalar_lea.sflag [#allocation12], %s1475
          %s1477 = sand.u32 %s245, 1
          %s1478 = smul.addr %s1477, 16
          %s1479 = scalar_lea.vmem [#allocation11], %s1478
          %1480 = dma.done %s1476, 256
        $region88: #{tpu_custom_call.1} parent=79 // pred_fallthru
          _
      $region80: #{tpu_custom_call.1} parent=5 // pred_fallthru
        _
    $region6: #{tpu_custom_call.1} parent=1 // loop_footer
      %s31 = sadd.s32 1, %s27
    $region7: #{tpu_custom_call.1} parent=1 // loop_footer_branch
      %26 = sbr.rel target = $region3
    $region8: #{tpu_custom_call.1} parent=1 // loop_exit
      _
    %1481 = vsyncpa [#allocation3], 1
    %s1482 = scalar_lea.sflag [#allocation3], 1
    %1483 = vsyncpa %s1482, 1
    %1484 = vsyncpa [#allocation6], 1
    %1485 = vsyncpa [#allocation9], 1
    %1486 = vsyncpa [#allocation4], 1
    %s1487 = scalar_lea.sflag [#allocation4], 1
    %1488 = vsyncpa %s1487, 1
    %1489 = vsyncpa [#allocation12], 1
    %s1490 = scalar_lea.sflag [#allocation12], 1
    %1491 = vsyncpa %s1490, 1

</llo_original>
